<compile_context>
chip_gen: v5e
topology: v5e:2x2
jax: 0.10.0
libtpu: 0.0.40
codegen_flags: <defaults>
</compile_context>

<pallas_src>
from collections import namedtuple

import jax
import jax.numpy as jnp
from jax.experimental import pallas as pl
from jax.experimental.pallas import tpu as pltpu


def _round_up(x, m):
    return (x + m - 1) // m * m


def _default_co_tile():
    # v5e: 128x128 MXUs -> 256-wide Cout tiles only add vreg/VMEM pressure.
    try:
        kind = jax.devices()[0].device_kind.lower()
    except Exception:
        return 256
    if "v5e" in kind or "v5 lite" in kind or "v5lite" in kind:
        return 128
    return 256


def _pick_row_block(H, Wp, tCo, pool):
    """Output rows per grid step: R | H, R even when pooling, and the f32
    (R*Wp, tCo) dot result kept near <= 64 KiB (vreg-pressure feedback)."""
    max_rows = max(1, (64 * 1024) // (4 * tCo))
    best = 2 if pool else 1
    for r in range(1, H + 1):
        if H % r:
            continue
        if pool and (r % 2):
            continue
        if r * Wp <= max_rows:
            best = r
    return best


# ----------------------------------------------------------------------------
# Conv (3x3 'same' or 1x1) + bias + ReLU [+ fused 2x2/2 maxpool] kernel
# ----------------------------------------------------------------------------
def _make_kernel(*, Hp, Wp, W, Cin, tCo, R, ksize, pool, out_dtype, pool_dtype):
    pad = ksize // 2
    M = R * Wp                       # matmul M: R output rows x padded width
    nwin = (R + 2 * pad) * Wp        # window rows DMA'd per grid step
    guard = 8 if ksize > 1 else 0    # tail rows read only by discarded columns
    use_col = ksize > 1
    taps = [(kh, kw) for kh in range(ksize) for kw in range(ksize)]

    def body(x_hbm, w_ref, b_ref, o_ref, p_ref, xwin, col, sem):
        n = pl.program_id(1)
        h = pl.program_id(2)
        # One contiguous DMA of the halo'd row window of image n (the wrapper
        # already zero-padded and flattened spatial, so no border handling or
        # pad-scratch zeroing happens in the kernel).
        row0 = (n * Hp + h * R) * Wp
        if guard:
            xwin[nwin:, :] = jnp.zeros((guard, Cin), xwin.dtype)
        cp = pltpu.make_async_copy(x_hbm.at[pl.ds(row0, nwin)],
                                   xwin.at[pl.ds(0, nwin)],
                                   sem.at[0])
        cp.start()
        cp.wait()

        if use_col:
            # im2col: tap (kh, kw) of output position m is window row
            # m + kh*Wp + kw, so each tap is a plain offset slice of the flat
            # window written to a lane-contiguous K column block.  One MXU dot
            # with K = 9*Cin then does all the accumulation inside the matmul.
            for kh, kw in taps:
                t = kh * ksize + kw
                col[:, t * Cin:(t + 1) * Cin] = xwin[pl.ds(kh * Wp + kw, M), :]
            lhs = col[...]
        else:
            lhs = xwin[...]

        res = jnp.dot(lhs, w_ref[...], preferred_element_type=jnp.float32)
        res = jnp.maximum(res + b_ref[...], 0.0)
        # (M, tCo) -> (R, Wp, tCo) is layout-preserving (Wp is a multiple of 8);
        # drop the padded/garbage right-border columns (offset-0 slice).
        y = res.reshape(R, Wp, tCo)[:, :W, :].astype(out_dtype)
        o_ref[0] = y

        if pool:
            # fused 2x2/2 maxpool epilogue (reshape + max; no strided slicing)
            ph = jnp.max(y.reshape(R // 2, 2, W, tCo), axis=1)
            pw = jnp.max(ph.reshape(R // 2, W // 2, 2, tCo), axis=2)
            p_ref[0] = pw.astype(pool_dtype)

    if pool and use_col:
        def kernel(x, w, b, o, p, xwin, col, sem):
            body(x, w, b, o, p, xwin, col, sem)
    elif pool:
        def kernel(x, w, b, o, p, xwin, sem):
            body(x, w, b, o, p, xwin, None, sem)
    elif use_col:
        def kernel(x, w, b, o, xwin, col, sem):
            body(x, w, b, o, None, xwin, col, sem)
    else:
        def kernel(x, w, b, o, xwin, sem):
            body(x, w, b, o, None, xwin, None, sem)
    return kernel


def _conv_relu(x, wflat, b, *, ksize, pool=False, out_dtype=jnp.bfloat16,
               pool_dtype=jnp.bfloat16, co_tile=None):
    """x: (N, H, W, Cin) NHWC; wflat: (ksize*ksize*Cin, Cout); b: (Cout,)."""
    N, H, W, Cin = x.shape
    K, Cout = wflat.shape
    assert K == ksize * ksize * Cin
    if pool:
        assert H % 2 == 0 and W % 2 == 0, "fused maxpool needs even H, W"

    if co_tile is None:
        co_tile = _default_co_tile()
    tCo = min(co_tile, Cout)
    assert Cout % tCo == 0

    pad = ksize // 2
    Hp = H + 2 * pad
    Wp = _round_up(W + 2 * pad, 8)       # multiple-of-8 padded width
    R = _pick_row_block(H, Wp, tCo, pool)
    M = R * Wp
    nwin = (R + 2 * pad) * Wp
    guard = 8 if ksize > 1 else 0

    # Zero-pad H/W once in HBM (bf16) and flatten spatial: every row-block
    # window is then one contiguous DMA and the kernel never builds padding.
    xb = x.astype(jnp.bfloat16)
    xp = jnp.pad(xb, ((0, 0), (pad, pad), (pad, Wp - W - pad), (0, 0)))
    xflat = xp.reshape(N * Hp * Wp, Cin)
    wb = wflat.astype(jnp.bfloat16)
    b2 = b.reshape(1, Cout).astype(jnp.float32)

    kernel = _make_kernel(Hp=Hp, Wp=Wp, W=W, Cin=Cin, tCo=tCo, R=R,
                          ksize=ksize, pool=pool, out_dtype=out_dtype,
                          pool_dtype=pool_dtype)

    o_shape = jax.ShapeDtypeStruct((N, H, W, Cout), out_dtype)
    o_spec = pl.BlockSpec((1, R, W, tCo), lambda c, n, h: (n, h, 0, c))
    if pool:
        out_shape = (o_shape,
                     jax.ShapeDtypeStruct((N, H // 2, W // 2, Cout), pool_dtype))
        out_specs = (o_spec,
                     pl.BlockSpec((1, R // 2, W // 2, tCo),
                                  lambda c, n, h: (n, h, 0, c)))
    else:
        out_shape = o_shape
        out_specs = o_spec

    scratch = [pltpu.VMEM((nwin + guard, Cin), jnp.bfloat16)]
    if ksize > 1:
        scratch.append(pltpu.VMEM((M, K), jnp.bfloat16))
    scratch.append(pltpu.SemaphoreType.DMA((1,)))

    # Explicit scoped-VMEM limit derived from the block bytes, capped for
    # v7x's 64 MiB physical VMEM.
    est = (nwin + guard) * max(Cin, 128) * 2
    if ksize > 1:
        est += M * max(K, 128) * 2
    est += 2 * K * tCo * 2                      # weight block, double-buffered
    est += M * tCo * 4                          # f32 dot result
    est += 2 * R * W * tCo * jnp.dtype(out_dtype).itemsize
    if pool:
        est += 2 * (R // 2) * (W // 2) * tCo * jnp.dtype(pool_dtype).itemsize
    vmem_limit = int(min(48 << 20, max(32 << 20, 2 * est + (4 << 20))))

    return pl.pallas_call(
        kernel,
        out_shape=out_shape,
        # c outermost: the (K, tCo) weight tile stays VMEM-resident across the
        # batch and all row blocks; the window DMA is issued per step, so all
        # three axes can be megacore-parallel without cross-step state.
        grid=(Cout // tCo, N, H // R),
        in_specs=[
            pl.BlockSpec(memory_space=pl.ANY),               # padded input (HBM)
            pl.BlockSpec((K, tCo), lambda c, n, h: (0, c)),  # weight tile
            pl.BlockSpec((1, tCo), lambda c, n, h: (0, c)),  # bias tile
        ],
        out_specs=out_specs,
        scratch_shapes=scratch,
        compiler_params=pltpu.CompilerParams(
            dimension_semantics=("parallel", "parallel", "parallel"),
            vmem_limit_bytes=vmem_limit),
    )(xflat, wb, b2)


def conv3x3_relu(x, w, b, **kw):
    """x: (N,H,W,Cin); w: (3,3,Cin,Cout) HWIO; b: (Cout,)."""
    Cin, Cout = w.shape[2], w.shape[3]
    return _conv_relu(x, w.reshape(9 * Cin, Cout), b, ksize=3, **kw)


def conv1_1_relu(x, w, b, **kw):
    """RGB stem conv: wrapper-side im2col of the 3x3x3 taps (K=27 -> 32) so the
    kernel runs a single well-filled 1x1-conv dot instead of nine K=3 matmuls
    from a 128-lane-padded 3-channel image."""
    N, H, W, Cin = x.shape
    assert Cin == 3 and w.shape[:3] == (3, 3, 3)
    xb = x.astype(jnp.bfloat16)
    xp = jnp.pad(xb, ((0, 0), (1, 1), (1, 1), (0, 0)))
    taps = [xp[:, kh:kh + H, kw:kw + W, :] for kh in range(3) for kw in range(3)]
    x27 = jnp.concatenate(taps, axis=-1)                   # (N, H, W, 27)
    x32 = jnp.pad(x27, ((0, 0), (0, 0), (0, 0), (0, 5)))   # pad K 27 -> 32
    w32 = jnp.pad(w.reshape(27, w.shape[-1]).astype(jnp.float32),
                  ((0, 5), (0, 0)))
    return _conv_relu(x32, w32, b, ksize=1, **kw)


# ----------------------------------------------------------------------------
# Parameters (deterministic synthetic init -- shapes match torchvision vgg16)
# ----------------------------------------------------------------------------
_VGG_CFG = [
    ("conv1_1", 3, 64), ("conv1_2", 64, 64),
    ("conv2_1", 64, 128), ("conv2_2", 128, 128),
    ("conv3_1", 128, 256), ("conv3_2", 256, 256), ("conv3_3", 256, 256),
    ("conv4_1", 256, 512), ("conv4_2", 512, 512), ("conv4_3", 512, 512),
]


def init_params(key):
    params = {}
    for name, cin, cout in _VGG_CFG:
        key, kw_, kb = jax.random.split(key, 3)
        scale = (9.0 * cin) ** -0.5
        w = jax.random.normal(kw_, (3, 3, cin, cout), jnp.float32) * scale  # HWIO
        b = jax.random.normal(kb, (cout,), jnp.float32) * 0.01
        params[name] = (w, b)
    return params


# ----------------------------------------------------------------------------
# Full Vgg16 forward (returns the 4 relu taps, like the PyTorch module)
# ----------------------------------------------------------------------------
VGGOutput = namedtuple("VGGOutput", ["relu1_2", "relu2_2", "relu3_3", "relu4_3"])


def vgg16_forward(params, x_nchw, *, nchw_f32_outputs=True):
    # NCHW -> NHWC once (channels on the lane axis); bf16 activations inside.
    x = jnp.transpose(x_nchw, (0, 2, 3, 1)).astype(jnp.bfloat16)

    # slice1: features[0:4]
    x = conv1_1_relu(x, *params["conv1_1"])
    relu1_2, x = conv3x3_relu(x, *params["conv1_2"], pool=True)  # slice2 pool fused

    # slice2: features[4:9]
    x = conv3x3_relu(x, *params["conv2_1"])
    relu2_2, x = conv3x3_relu(x, *params["conv2_2"], pool=True)

    # slice3: features[9:16]
    x = conv3x3_relu(x, *params["conv3_1"])
    x = conv3x3_relu(x, *params["conv3_2"])
    relu3_3, x = conv3x3_relu(x, *params["conv3_3"], pool=True)

    # slice4: features[16:23]  (the source's range(9,23) would re-apply layers
    # 9..15 and crash on a channel mismatch; the intended slice is implemented)
    x = conv3x3_relu(x, *params["conv4_1"])
    x = conv3x3_relu(x, *params["conv4_2"])
    relu4_3 = conv3x3_relu(x, *params["conv4_3"])

    taps = (relu1_2, relu2_2, relu3_3, relu4_3)
    if nchw_f32_outputs:
        # PyTorch-compatible NCHW f32 taps.  A downstream loss that can take
        # NHWC bf16 should pass nchw_f32_outputs=False and skip these copies.
        taps = tuple(jnp.transpose(t, (0, 3, 1, 2)).astype(jnp.float32)
                     for t in taps)
    return VGGOutput(*taps)


# ----------------------------------------------------------------------------
# Pure-JAX references for numerical sanity checks
# ----------------------------------------------------------------------------
def _reference_conv_relu(x, w, b):
    xr = x.astype(jnp.bfloat16).astype(jnp.float32)
    wr = w.astype(jnp.bfloat16).astype(jnp.float32)
    y = jax.lax.conv_general_dilated(
        xr, wr, window_strides=(1, 1), padding="SAME",
        dimension_numbers=("NHWC", "HWIO", "NHWC"))
    return jnp.maximum(y + b.reshape(1, 1, 1, -1), 0.0)


def _reference_pool(y):
    N, H, W, C = y.shape
    return jnp.max(y.reshape(N, H // 2, 2, W // 2, 2, C), axis=(2, 4))


if __name__ == "__main__":
    key = jax.random.PRNGKey(0)
    pkey, xkey, ckey = jax.random.split(key, 3)

    # --- check 1: 3x3 im2col path + fused pool (Cin=32 -> 128) ---------------
    k1, k2, k3 = jax.random.split(ckey, 3)
    xt = jax.random.normal(k1, (2, 8, 8, 32), jnp.float32)
    wt = jax.random.normal(k2, (3, 3, 32, 128), jnp.float32) * (9.0 * 32) ** -0.5
    bt = jax.random.normal(k3, (128,), jnp.float32) * 0.01
    y_k, p_k = conv3x3_relu(xt, wt, bt, pool=True)
    y_r = _reference_conv_relu(xt, wt, bt)
    p_r = _reference_pool(y_r)
    assert jnp.allclose(y_k.astype(jnp.float32), y_r, rtol=2e-2, atol=2e-2), \
        "conv+relu mismatch"
    assert jnp.allclose(p_k.astype(jnp.float32), p_r, rtol=3e-2, atol=3e-2), \
        "fused pool mismatch"

    # --- check 2: tiny spatial + multiple Cout tiles (Cin=256 -> 512) --------
    k4, k5, k6 = jax.random.split(k1, 3)
    xt2 = jax.random.normal(k4, (1, 4, 4, 256), jnp.float32)
    wt2 = jax.random.normal(k5, (3, 3, 256, 512), jnp.float32) * (9.0 * 256) ** -0.5
    bt2 = jax.random.normal(k6, (512,), jnp.float32) * 0.01
    y2_k = conv3x3_relu(xt2, wt2, bt2)
    y2_r = _reference_conv_relu(xt2, wt2, bt2)
    assert jnp.allclose(y2_k.astype(jnp.float32), y2_r, rtol=2e-2, atol=2e-2), \
        "conv (multi Cout tile) mismatch"

    # --- check 3: RGB stem (wrapper im2col + 1x1 kernel path) ----------------
    k7, k8, k9 = jax.random.split(k4, 3)
    xt3 = jax.random.normal(k7, (2, 16, 16, 3), jnp.float32)
    wt3 = jax.random.normal(k8, (3, 3, 3, 64), jnp.float32) * (9.0 * 3) ** -0.5
    bt3 = jax.random.normal(k9, (64,), jnp.float32) * 0.01
    y3_k = conv1_1_relu(xt3, wt3, bt3)
    y3_r = _reference_conv_relu(xt3, wt3, bt3)
    assert jnp.allclose(y3_k.astype(jnp.float32), y3_r, rtol=2e-2, atol=2e-2), \
        "conv1_1 (RGB stem) mismatch"

    # --- full VGG16 forward ---------------------------------------------------
    params = init_params(pkey)
    x = jax.random.normal(xkey, (2, 3, 16, 16), jnp.float32)  # NCHW like PyTorch

    out = jax.jit(vgg16_forward)(params, x)
    out = jax.block_until_ready(out)

    assert out.relu1_2.shape == (2, 64, 16, 16)
    assert out.relu2_2.shape == (2, 128, 8, 8)
    assert out.relu3_3.shape == (2, 256, 4, 4)
    assert out.relu4_3.shape == (2, 512, 2, 2)
    assert all(bool(jnp.all(jnp.isfinite(t))) for t in out)
    print("KERNEL_OK")
</pallas_src>

<mosaic_0001>
module attributes {stable_mosaic.version = 11 : i64} {
  func.func @kernel(%arg0: i32, %arg1: i32, %arg2: i32, %arg3: memref<320x32xbf16, #tpu.memory_space<any>>, %arg4: memref<288x128xbf16, #tpu.memory_space<vmem>>, %arg5: memref<1x128xf32, #tpu.memory_space<vmem>>, %arg6: memref<1x8x8x128xbf16, #tpu.memory_space<vmem>>, %arg7: memref<1x4x4x128xbf16, #tpu.memory_space<vmem>>, %arg8: memref<168x32xbf16, #tpu.memory_space<vmem>>, %arg9: memref<128x288xbf16, #tpu.memory_space<vmem>>, %arg10: memref<1x!tpu.dma_semaphore, #tpu.memory_space<semaphore_mem>>) attributes {dimension_semantics = [#tpu.dimension_semantics<parallel>, #tpu.dimension_semantics<parallel>, #tpu.dimension_semantics<parallel>], iteration_bounds = array<i64: 1, 2, 1>, scalar_prefetch = 0 : i64, scratch_operands = 3 : i64, tpu.core_type = #tpu.core_type<tc>, window_params = [{}, {transform_indices = @transform_1, window_bounds = array<i64: 288, 128>}, {transform_indices = @transform_2, window_bounds = array<i64: 1, 128>}, {transform_indices = @transform_3, window_bounds = array<i64: 1, 8, 8, 128>}, {transform_indices = @transform_4, window_bounds = array<i64: 1, 4, 4, 128>}]} {
    %c10_i32 = arith.constant 10 : i32
    %0 = arith.muli %arg1, %c10_i32 : i32
    %c8_i32 = arith.constant 8 : i32
    %1 = arith.muli %arg2, %c8_i32 : i32
    %2 = arith.addi %0, %1 : i32
    %c16_i32 = arith.constant 16 : i32
    %3 = arith.muli %2, %c16_i32 : i32
    %cst = arith.constant 0.000000e+00 : bf16
    %4 = vector.broadcast %cst : bf16 to vector<8x32xbf16>
    %c160 = arith.constant 160 : index
    %c0 = arith.constant 0 : index
    %5 = vector.load %arg8[%c160, %c0] : memref<168x32xbf16, #tpu.memory_space<vmem>>, vector<8x32xbf16>
    tpu.vector_store %arg8[%c160, %c0], %4 {strides = array<i32>} : memref<168x32xbf16, #tpu.memory_space<vmem>>, vector<8x32xbf16>,
    %c0_i32 = arith.constant 0 : i32
    %c0_i32_0 = arith.constant 0 : i32
    %6 = tpu.memref_slice %arg3[%3, %c0_i32_0] : memref<320x32xbf16, #tpu.memory_space<any>> -> memref<160x32xbf16, #tpu.memory_space<any>>
    %c0_i32_1 = arith.constant 0 : i32
    %c0_i32_2 = arith.constant 0 : i32
    %7 = tpu.memref_slice %arg8[%c0_i32_1, %c0_i32_2] : memref<168x32xbf16, #tpu.memory_space<vmem>> -> memref<160x32xbf16, #tpu.memory_space<vmem>>
    %8 = tpu.memref_slice %arg10[%c0_i32] : memref<1x!tpu.dma_semaphore, #tpu.memory_space<semaphore_mem>> -> memref<1x!tpu.dma_semaphore, #tpu.memory_space<semaphore_mem>>
    %9 = tpu.memref_squeeze %8 : memref<1x!tpu.dma_semaphore, #tpu.memory_space<semaphore_mem>> -> memref<!tpu.dma_semaphore, #tpu.memory_space<semaphore_mem>>
    tpu.enqueue_dma source(%6 : memref<160x32xbf16, #tpu.memory_space<any>>) target(%7 : memref<160x32xbf16, #tpu.memory_space<vmem>>) target_semaphore(%9 : memref<!tpu.dma_semaphore, #tpu.memory_space<semaphore_mem>>)
    %c0_i32_3 = arith.constant 0 : i32
    %c0_i32_4 = arith.constant 0 : i32
    %10 = tpu.memref_slice %arg3[%3, %c0_i32_4] : memref<320x32xbf16, #tpu.memory_space<any>> -> memref<160x32xbf16, #tpu.memory_space<any>>
    %c0_i32_5 = arith.constant 0 : i32
    %c0_i32_6 = arith.constant 0 : i32
    %11 = tpu.memref_slice %arg8[%c0_i32_5, %c0_i32_6] : memref<168x32xbf16, #tpu.memory_space<vmem>> -> memref<160x32xbf16, #tpu.memory_space<vmem>>
    %12 = tpu.memref_slice %arg10[%c0_i32_3] : memref<1x!tpu.dma_semaphore, #tpu.memory_space<semaphore_mem>> -> memref<1x!tpu.dma_semaphore, #tpu.memory_space<semaphore_mem>>
    %13 = tpu.memref_squeeze %12 : memref<1x!tpu.dma_semaphore, #tpu.memory_space<semaphore_mem>> -> memref<!tpu.dma_semaphore, #tpu.memory_space<semaphore_mem>>
    tpu.wait_dma2 semaphore(%13 : memref<!tpu.dma_semaphore, #tpu.memory_space<semaphore_mem>>) src(%10 : memref<160x32xbf16, #tpu.memory_space<any>>) dst(%11 : memref<160x32xbf16, #tpu.memory_space<vmem>>)
    %c0_7 = arith.constant 0 : index
    %c0_8 = arith.constant 0 : index
    %14 = vector.load %arg8[%c0_7, %c0_8] : memref<168x32xbf16, #tpu.memory_space<vmem>>, vector<128x32xbf16>
    %c0_9 = arith.constant 0 : index
    %c0_10 = arith.constant 0 : index
    %15 = vector.load %arg9[%c0_9, %c0_10] : memref<128x288xbf16, #tpu.memory_space<vmem>>, vector<128x32xbf16>
    tpu.vector_store %arg9[%c0_9, %c0_10], %14 {strides = array<i32>} : memref<128x288xbf16, #tpu.memory_space<vmem>>, vector<128x32xbf16>,
    %c1 = arith.constant 1 : index
    %c0_11 = arith.constant 0 : index
    %16 = vector.load %arg8[%c1, %c0_11] : memref<168x32xbf16, #tpu.memory_space<vmem>>, vector<128x32xbf16>
    %c0_12 = arith.constant 0 : index
    %c32 = arith.constant 32 : index
    %17 = vector.load %arg9[%c0_12, %c32] : memref<128x288xbf16, #tpu.memory_space<vmem>>, vector<128x32xbf16>
    tpu.vector_store %arg9[%c0_12, %c32], %16 {strides = array<i32>} : memref<128x288xbf16, #tpu.memory_space<vmem>>, vector<128x32xbf16>,
    %c2 = arith.constant 2 : index
    %c0_13 = arith.constant 0 : index
    %18 = vector.load %arg8[%c2, %c0_13] : memref<168x32xbf16, #tpu.memory_space<vmem>>, vector<128x32xbf16>
    %c0_14 = arith.constant 0 : index
    %c64 = arith.constant 64 : index
    %19 = vector.load %arg9[%c0_14, %c64] : memref<128x288xbf16, #tpu.memory_space<vmem>>, vector<128x32xbf16>
    tpu.vector_store %arg9[%c0_14, %c64], %18 {strides = array<i32>} : memref<128x288xbf16, #tpu.memory_space<vmem>>, vector<128x32xbf16>,
    %c16 = arith.constant 16 : index
    %c0_15 = arith.constant 0 : index
    %20 = vector.load %arg8[%c16, %c0_15] : memref<168x32xbf16, #tpu.memory_space<vmem>>, vector<128x32xbf16>
    %c0_16 = arith.constant 0 : index
    %c96 = arith.constant 96 : index
    %21 = vector.load %arg9[%c0_16, %c96] : memref<128x288xbf16, #tpu.memory_space<vmem>>, vector<128x32xbf16>
    tpu.vector_store %arg9[%c0_16, %c96], %20 {strides = array<i32>} : memref<128x288xbf16, #tpu.memory_space<vmem>>, vector<128x32xbf16>,
    %c17 = arith.constant 17 : index
    %c0_17 = arith.constant 0 : index
    %22 = vector.load %arg8[%c17, %c0_17] : memref<168x32xbf16, #tpu.memory_space<vmem>>, vector<128x32xbf16>
    %c0_18 = arith.constant 0 : index
    %c128 = arith.constant 128 : index
    %23 = vector.load %arg9[%c0_18, %c128] : memref<128x288xbf16, #tpu.memory_space<vmem>>, vector<128x32xbf16>
    tpu.vector_store %arg9[%c0_18, %c128], %22 {strides = array<i32>} : memref<128x288xbf16, #tpu.memory_space<vmem>>, vector<128x32xbf16>,
    %c18 = arith.constant 18 : index
    %c0_19 = arith.constant 0 : index
    %24 = vector.load %arg8[%c18, %c0_19] : memref<168x32xbf16, #tpu.memory_space<vmem>>, vector<128x32xbf16>
    %c0_20 = arith.constant 0 : index
    %c160_21 = arith.constant 160 : index
    %25 = vector.load %arg9[%c0_20, %c160_21] : memref<128x288xbf16, #tpu.memory_space<vmem>>, vector<128x32xbf16>
    tpu.vector_store %arg9[%c0_20, %c160_21], %24 {strides = array<i32>} : memref<128x288xbf16, #tpu.memory_space<vmem>>, vector<128x32xbf16>,
    %c32_22 = arith.constant 32 : index
    %c0_23 = arith.constant 0 : index
    %26 = vector.load %arg8[%c32_22, %c0_23] : memref<168x32xbf16, #tpu.memory_space<vmem>>, vector<128x32xbf16>
    %c0_24 = arith.constant 0 : index
    %c192 = arith.constant 192 : index
    %27 = vector.load %arg9[%c0_24, %c192] : memref<128x288xbf16, #tpu.memory_space<vmem>>, vector<128x32xbf16>
    tpu.vector_store %arg9[%c0_24, %c192], %26 {strides = array<i32>} : memref<128x288xbf16, #tpu.memory_space<vmem>>, vector<128x32xbf16>,
    %c33 = arith.constant 33 : index
    %c0_25 = arith.constant 0 : index
    %28 = vector.load %arg8[%c33, %c0_25] : memref<168x32xbf16, #tpu.memory_space<vmem>>, vector<128x32xbf16>
    %c0_26 = arith.constant 0 : index
    %c224 = arith.constant 224 : index
    %29 = vector.load %arg9[%c0_26, %c224] : memref<128x288xbf16, #tpu.memory_space<vmem>>, vector<128x32xbf16>
    tpu.vector_store %arg9[%c0_26, %c224], %28 {strides = array<i32>} : memref<128x288xbf16, #tpu.memory_space<vmem>>, vector<128x32xbf16>,
    %c34 = arith.constant 34 : index
    %c0_27 = arith.constant 0 : index
    %30 = vector.load %arg8[%c34, %c0_27] : memref<168x32xbf16, #tpu.memory_space<vmem>>, vector<128x32xbf16>
    %c0_28 = arith.constant 0 : index
    %c256 = arith.constant 256 : index
    %31 = vector.load %arg9[%c0_28, %c256] : memref<128x288xbf16, #tpu.memory_space<vmem>>, vector<128x32xbf16>
    tpu.vector_store %arg9[%c0_28, %c256], %30 {strides = array<i32>} : memref<128x288xbf16, #tpu.memory_space<vmem>>, vector<128x32xbf16>,
    %c0_29 = arith.constant 0 : index
    %c0_30 = arith.constant 0 : index
    %32 = vector.load %arg9[%c0_29, %c0_30] : memref<128x288xbf16, #tpu.memory_space<vmem>>, vector<128x288xbf16>
    %c0_31 = arith.constant 0 : index
    %c0_32 = arith.constant 0 : index
    %33 = vector.load %arg4[%c0_31, %c0_32] : memref<288x128xbf16, #tpu.memory_space<vmem>>, vector<288x128xbf16>
    %cst_33 = arith.constant dense<0.000000e+00> : vector<128x128xf32>
    %34 = tpu.matmul %32, %33, %cst_33 {dimension_numbers = #tpu.dot_dimension_numbers<[1], [0], [0], [1], [0, 0, 1, 1], [], []>} : vector<128x288xbf16>, vector<288x128xbf16>, vector<128x128xf32> -> vector<128x128xf32>
    %c0_34 = arith.constant 0 : index
    %c0_35 = arith.constant 0 : index
    %35 = vector.load %arg5[%c0_34, %c0_35] : memref<1x128xf32, #tpu.memory_space<vmem>>, vector<1x128xf32>
    %36 = vector.broadcast %35 : vector<1x128xf32> to vector<128x128xf32>
    %37 = arith.addf %34, %36 : vector<128x128xf32>
    %cst_36 = arith.constant 0.000000e+00 : f32
    %38 = vector.broadcast %cst_36 : f32 to vector<128x128xf32>
    %39 = arith.maximumf %37, %38 : vector<128x128xf32>
    %40 = vector.shape_cast %39 : vector<128x128xf32> to vector<8x16x128xf32>
    %41 = vector.extract_strided_slice %40 {offsets = [0, 0, 0], sizes = [8, 8, 128], strides = [1, 1, 1]} : vector<8x16x128xf32> to vector<8x8x128xf32>
    %42 = arith.truncf %41 : vector<8x8x128xf32> to vector<8x8x128xbf16>
    %c0_37 = arith.constant 0 : index
    %c0_38 = arith.constant 0 : index
    %c0_39 = arith.constant 0 : index
    %c0_40 = arith.constant 0 : index
    %43 = vector.load %arg6[%c0_37, %c0_38, %c0_39, %c0_40] : memref<1x8x8x128xbf16, #tpu.memory_space<vmem>>, vector<1x8x8x128xbf16>
    %44 = vector.shape_cast %43 : vector<1x8x8x128xbf16> to vector<8x8x128xbf16>
    %45 = vector.shape_cast %42 : vector<8x8x128xbf16> to vector<1x8x8x128xbf16>
    tpu.vector_store %arg6[%c0_37, %c0_38, %c0_39, %c0_40], %45 {strides = array<i32>} : memref<1x8x8x128xbf16, #tpu.memory_space<vmem>>, vector<1x8x8x128xbf16>,
    %46 = vector.shape_cast %42 : vector<8x8x128xbf16> to vector<4x2x8x128xbf16>
    %cst_41 = arith.constant dense<0xFF80> : vector<4x8x128xbf16>
    %47 = vector.multi_reduction <maximumf>, %46, %cst_41 [1] : vector<4x2x8x128xbf16> to vector<4x8x128xbf16>
    %48 = vector.shape_cast %47 : vector<4x8x128xbf16> to vector<4x4x2x128xbf16>
    %cst_42 = arith.constant dense<0xFF80> : vector<4x4x128xbf16>
    %49 = vector.multi_reduction <maximumf>, %48, %cst_42 [2] : vector<4x4x2x128xbf16> to vector<4x4x128xbf16>
    %c0_43 = arith.constant 0 : index
    %c0_44 = arith.constant 0 : index
    %c0_45 = arith.constant 0 : index
    %c0_46 = arith.constant 0 : index
    %50 = vector.load %arg7[%c0_43, %c0_44, %c0_45, %c0_46] : memref<1x4x4x128xbf16, #tpu.memory_space<vmem>>, vector<1x4x4x128xbf16>
    %51 = vector.shape_cast %50 : vector<1x4x4x128xbf16> to vector<4x4x128xbf16>
    %52 = vector.shape_cast %49 : vector<4x4x128xbf16> to vector<1x4x4x128xbf16>
    tpu.vector_store %arg7[%c0_43, %c0_44, %c0_45, %c0_46], %52 {strides = array<i32>} : memref<1x4x4x128xbf16, #tpu.memory_space<vmem>>, vector<1x4x4x128xbf16>,
    return
  }
  func.func @transform_1(%arg0: i32, %arg1: i32, %arg2: i32) -> (i32, i32) {
    %c0_i32 = arith.constant 0 : i32
    %c0_i32_0 = arith.constant 0 : i32
    return %c0_i32, %arg0 : i32, i32
  }
  func.func @transform_2(%arg0: i32, %arg1: i32, %arg2: i32) -> (i32, i32) {
    %c0_i32 = arith.constant 0 : i32
    %c0_i32_0 = arith.constant 0 : i32
    return %c0_i32, %arg0 : i32, i32
  }
  func.func @transform_3(%arg0: i32, %arg1: i32, %arg2: i32) -> (i32, i32, i32, i32) {
    %c0_i32 = arith.constant 0 : i32
    %c0_i32_0 = arith.constant 0 : i32
    return %arg1, %arg2, %c0_i32, %arg0 : i32, i32, i32, i32
  }
  func.func @transform_4(%arg0: i32, %arg1: i32, %arg2: i32) -> (i32, i32, i32, i32) {
    %c0_i32 = arith.constant 0 : i32
    %c0_i32_0 = arith.constant 0 : i32
    return %arg1, %arg2, %c0_i32, %arg0 : i32, i32, i32, i32
  }
}

</mosaic_0001>

<llo_original>
// kernel: tpu_custom_call.1
$region0: #{tpu_custom_call.1}
  #allocation0 [shape = 'u32[]', space=smem, size = 0x4, offset = 0x4, fixed_abs, tag = 'smem constant byte address 0x4 - core index']
  #allocation1 [shape = 'u32[72,128]{1,0:T(1,128)}', space=vmem, size = 0x9000, scoped, tag = 'internal scratch']
  #allocation2 [shape = 'bf16[168,32]{1,0:T(8,128)(2,1)}', space=vmem, size = 0xa800, scoped, tag = 'scratch operand']
  #allocation3 [shape = 'bf16[128,288]{1,0:T(8,128)(2,1)}', space=vmem, size = 0x18000, scoped, tag = 'scratch operand']
  #allocation4 [shape = 's32[1]{0}', space=sflag, size = 0x4, scoped, tag = 'scratch operand']
  #allocation9 [shape = 's32[]', space=sflag, size = 0x4, offset = 0, fixed_abs, tag = 'sflag constant byte address 0x0 - dummy sync flag']
  %s0 = inlined_call_operand.vmem [shape: bf16[320,32], index: 0, kind: input, shape index: {}]
  %s1 = inlined_call_operand.vmem [shape: bf16[288,128], index: 1, kind: input, shape index: {}]
  %s2 = inlined_call_operand.vmem [shape: f32[1,128], index: 2, kind: input, shape index: {}]
  %s3 = inlined_call_operand.hbm [shape: bf16[2,8,8,128], index: 3, kind: output, shape index: {0}]
  %s4 = inlined_call_operand.hbm [shape: bf16[2,4,4,128], index: 4, kind: output, shape index: {1}]
  %5 = xla_tuple %s3, %s4
  %s6 = sld [smem:[#allocation0]]
  $region68: #{tpu_custom_call.1} parent=0
    _
  %s8 = ssub.s32 1, %s6
  %s9 = scalar_select 0, %s8, %s6
  $region1: #{tpu_custom_call.1} parent=0
    #allocation5 [shape = 'u8[32768]{0}', space=vmem, size = 0x8000, scoped, tag = 'output window, operand 0']
    #allocation6 [shape = 's32[2]{0}', space=sflag, size = 0x8, scoped, tag = 'scoped memory for tpu_custom_call.1']
    #allocation7 [shape = 'u8[8192]{0}', space=vmem, size = 0x2000, scoped, tag = 'output window, operand 1']
    #allocation8 [shape = 's32[2]{0}', space=sflag, size = 0x8, scoped, tag = 'scoped memory for tpu_custom_call.1']
    %10 = vsyncpa [#allocation6], 0
    %s11 = scalar_lea.sflag [#allocation6], 1
    %12 = vsyncpa %s11, 0
    %13 = vsyncpa [#allocation8], 0
    %s14 = scalar_lea.sflag [#allocation8], 1
    %15 = vsyncpa %s14, 0
    loop: start=0, step=1, limit=4
    $region2: #{tpu_custom_call.1} parent=1 // loop_pre_header
      _
    $region3: #{tpu_custom_call.1} parent=1 // loop_header
      %s17 = sphi 0, %s21
      %p18 = scmp.ge.s32.totalorder %s17, 4
      %s24 = sphi 0, %s43
      %s25 = sphi 0, %s39
      %s26 = sphi 0, %s35
      %s27 = sphi 0, %s24
      %s28 = sphi 0, %s25
      %s29 = sphi 0, %s26
      %s30 = sphi 0, %s27
      %s31 = sphi 0, %s28
      %s32 = sphi 0, %s29
      %s46 = sphi 0, %s48
      %s49 = sphi 0, %s46
      %s50 = sphi 0, %s49
      %s66 = sphi 0, %s50
      %s72 = sphi 0, %s74
      %s75 = sphi 0, %s72
      %s76 = sphi 0, %s75
      %s92 = sphi 0, %s76
      %s102 = sphi 0, %s104
      %s105 = sphi 0, %s102
      %s106 = sphi 0, %s105
      %s122 = sphi 0, %s106
      %s132 = sphi 0, %s134
      %s135 = sphi 0, %s132
      %s136 = sphi 0, %s135
      %s152 = sphi 0, %s136
    $region4: #{tpu_custom_call.1} parent=1 // loop_header_branch
      %20 = sbr.rel (%p18) target = $region8
    $region5: #{tpu_custom_call.1} parent=1 // loop_body
      %s22 = ssub.s32 %s17, 1
      %s23 = ssub.s32 %s17, 2
      %s33 = sadd.s32 1, %s26
      %p34 = scmp.ge.s32.totalorder %s33, 1
      %s35 = scalar_select %p34, 0, %s33
      %s36 = sadd.s32 1, %s25
      %s37 = scalar_select %p34, %s36, %s25
      %p38 = scmp.ge.s32.totalorder %s37, 2
      %s39 = scalar_select %p38, 0, %s37
      %s40 = sadd.s32 1, %s24
      %s41 = scalar_select %p38, %s40, %s24
      %p42 = scmp.ge.s32.totalorder %s41, 1
      %s43 = scalar_select %p42, 0, %s41
      %s44 = ssub.s32 %s24, %s43
      %p45 = scmp.eq.s32.totalorder %s44, 0
      %s47 = sadd.s32 %s46, 1
      %s48 = scalar_select %p45, %s46, %s47
      %p51 = pneg %p45
      %p52 = scmp.eq.s32.totalorder %s17, 1
      %p53 = por %p51, %p52
      %p54 = scmp.ne.s32.totalorder %s46, %s49
      %p55 = scmp.eq.s32.totalorder %s17, 0
      %p56 = por %p54, %p55
      %p57 = scmp.ne.s32.totalorder %s46, %s49
      %p58 = scmp.eq.s32.totalorder %s22, 1
      %p59 = por %p57, %p58
      %p60 = scmp.ne.s32.totalorder %s49, %s50
      %p61 = scmp.eq.s32.totalorder %s22, 0
      %p62 = por %p60, %p61
      %p63 = scmp.ne.s32.totalorder %s49, %s50
      %p64 = scmp.eq.s32.totalorder %s23, 1
      %p65 = por %p63, %p64
      %p67 = scmp.ne.s32.totalorder %s50, %s66
      %p68 = scmp.eq.s32.totalorder %s23, 0
      %p69 = por %p67, %p68
      %s70 = ssub.s32 %s24, %s43
      %p71 = scmp.eq.s32.totalorder %s70, 0
      %s73 = sadd.s32 %s72, 1
      %s74 = scalar_select %p71, %s72, %s73
      %p77 = pneg %p71
      %p78 = scmp.eq.s32.totalorder %s17, 1
      %p79 = por %p77, %p78
      %p80 = scmp.ne.s32.totalorder %s72, %s75
      %p81 = scmp.eq.s32.totalorder %s17, 0
      %p82 = por %p80, %p81
      %p83 = scmp.ne.s32.totalorder %s72, %s75
      %p84 = scmp.eq.s32.totalorder %s22, 1
      %p85 = por %p83, %p84
      %p86 = scmp.ne.s32.totalorder %s75, %s76
      %p87 = scmp.eq.s32.totalorder %s22, 0
      %p88 = por %p86, %p87
      %p89 = scmp.ne.s32.totalorder %s75, %s76
      %p90 = scmp.eq.s32.totalorder %s23, 1
      %p91 = por %p89, %p90
      %p93 = scmp.ne.s32.totalorder %s76, %s92
      %p94 = scmp.eq.s32.totalorder %s23, 0
      %p95 = por %p93, %p94
      %s96 = ssub.s32 %s25, %s39
      %s97 = ssub.s32 %s26, %s35
      %s98 = sor.u32 %s96, %s97
      %s99 = ssub.s32 %s24, %s43
      %s100 = sor.u32 %s98, %s99
      %p101 = scmp.eq.s32.totalorder %s100, 0
      %s103 = sadd.s32 %s102, 1
      %s104 = scalar_select %p101, %s102, %s103
      %p107 = pneg %p101
      %p108 = scmp.eq.s32.totalorder %s17, 1
      %p109 = por %p107, %p108
      %p110 = scmp.ne.s32.totalorder %s102, %s105
      %p111 = scmp.eq.s32.totalorder %s17, 0
      %p112 = por %p110, %p111
      %p113 = scmp.ne.s32.totalorder %s102, %s105
      %p114 = scmp.eq.s32.totalorder %s22, 1
      %p115 = por %p113, %p114
      %p116 = scmp.ne.s32.totalorder %s105, %s106
      %p117 = scmp.eq.s32.totalorder %s22, 0
      %p118 = por %p116, %p117
      %p119 = scmp.ne.s32.totalorder %s105, %s106
      %p120 = scmp.eq.s32.totalorder %s23, 1
      %p121 = por %p119, %p120
      %p123 = scmp.ne.s32.totalorder %s106, %s122
      %p124 = scmp.eq.s32.totalorder %s23, 0
      %p125 = por %p123, %p124
      %s126 = ssub.s32 %s25, %s39
      %s127 = ssub.s32 %s26, %s35
      %s128 = sor.u32 %s126, %s127
      %s129 = ssub.s32 %s24, %s43
      %s130 = sor.u32 %s128, %s129
      %p131 = scmp.eq.s32.totalorder %s130, 0
      %s133 = sadd.s32 %s132, 1
      %s134 = scalar_select %p131, %s132, %s133
      %p137 = pneg %p131
      %p138 = scmp.eq.s32.totalorder %s17, 1
      %p139 = por %p137, %p138
      %p140 = scmp.ne.s32.totalorder %s132, %s135
      %p141 = scmp.eq.s32.totalorder %s17, 0
      %p142 = por %p140, %p141
      %p143 = scmp.ne.s32.totalorder %s132, %s135
      %p144 = scmp.eq.s32.totalorder %s22, 1
      %p145 = por %p143, %p144
      %p146 = scmp.ne.s32.totalorder %s135, %s136
      %p147 = scmp.eq.s32.totalorder %s22, 0
      %p148 = por %p146, %p147
      %p149 = scmp.ne.s32.totalorder %s135, %s136
      %p150 = scmp.eq.s32.totalorder %s23, 1
      %p151 = por %p149, %p150
      %p153 = scmp.ne.s32.totalorder %s136, %s152
      %p154 = scmp.eq.s32.totalorder %s23, 0
      %p155 = por %p153, %p154
      %p156 = scmp.le.s32.totalorder 1, %s17
      %p157 = scmp.lt.s32.totalorder %s17, 3
      %p158 = pnand %p156, %p157
      %p159 = pneg %p158
      // Predicated region
      $region9: #{tpu_custom_call.1} parent=5 // pred_check
        _
      $region10: #{tpu_custom_call.1} parent=5 // pred_check_branch
        %161 = sbr.rel (%p158) target = $region12
      $region11: #{tpu_custom_call.1} parent=5 // pred_region
        %s162 = ssub.s32 %s17, 1
        // Predicated region
        $region13: #{tpu_custom_call.1} parent=11 // pred_check
          %p163 = pneg %p62
        $region14: #{tpu_custom_call.1} parent=11 // pred_check_branch
          %165 = sbr.rel (%p163) target = $region16
        $region15: #{tpu_custom_call.1} parent=11 // pred_region
          %p166 = scmp.lt.s32.totalorder %s27, 0
          %s167 = scalar_select %p166, %s27, 0
          %s168 = smul.addr %s167, 4
          %s169 = scalar_lea.vmem %s1, %s168
        $region16: #{tpu_custom_call.1} parent=11 // pred_fallthru
          _
        // Predicated region
        $region17: #{tpu_custom_call.1} parent=11 // pred_check
          %p170 = pneg %p88
        $region18: #{tpu_custom_call.1} parent=11 // pred_check_branch
          %172 = sbr.rel (%p170) target = $region20
        $region19: #{tpu_custom_call.1} parent=11 // pred_region
          %p173 = scmp.lt.s32.totalorder %s27, 0
          %s174 = scalar_select %p173, %s27, 0
          %s175 = scalar_lea.vmem %s2, %s174
        $region20: #{tpu_custom_call.1} parent=11 // pred_fallthru
          _
      $region12: #{tpu_custom_call.1} parent=5 // pred_fallthru
        _
      %p176 = scmp.lt.s32.totalorder %s17, 2
      // Predicated region
      $region21: #{tpu_custom_call.1} parent=5 // pred_check
        %p177 = pneg %p176
      $region22: #{tpu_custom_call.1} parent=5 // pred_check_branch
        %179 = sbr.rel (%p177) target = $region24
      $region23: #{tpu_custom_call.1} parent=5 // pred_region
        _
      $region24: #{tpu_custom_call.1} parent=5 // pred_fallthru
        _
      %p180 = scmp.le.s32.totalorder 1, %s17
      %p181 = scmp.lt.s32.totalorder %s17, 3
      %p182 = pnand %p180, %p181
      %p183 = pneg %p182
      // Predicated region
      $region25: #{tpu_custom_call.1} parent=5 // pred_check
        _
      $region26: #{tpu_custom_call.1} parent=5 // pred_check_branch
        %185 = sbr.rel (%p182) target = $region28
      $region27: #{tpu_custom_call.1} parent=5 // pred_region
        %s186 = ssub.s32 %s17, 1
        %p187 = scmp.lt.s32.totalorder %s27, 0
        %s188 = scalar_select %p187, %s27, 0
        %s189 = smul.addr %s188, 4
        %s190 = scalar_lea.vmem %s1, %s189
        %p191 = pneg %p62
        %p192 = pneg %p59
        %p193 = scmp.lt.s32.totalorder %s27, 0
        %s194 = scalar_select %p193, %s27, 0
        %s195 = scalar_lea.vmem %s2, %s194
        %p196 = pneg %p88
        %p197 = pneg %p85
        %p198 = pneg %p118
        %p199 = pneg %p115
        %s200 = sand.u32 %s105, 1
        %s201 = scalar_lea.sflag [#allocation6], %s200
        %s202 = sand.u32 %s105, 1
        %s203 = smul.addr %s202, 32
        %s204 = scalar_lea.vmem [#allocation5], %s203
        %p205 = pneg %p148
        %p206 = pneg %p145
        %s207 = sand.u32 %s135, 1
        %s208 = scalar_lea.sflag [#allocation8], %s207
        %s209 = sand.u32 %s135, 1
        %s210 = smul.addr %s209, 8
        %s211 = scalar_lea.vmem [#allocation7], %s210
        %p212 = scmp.lt.s32.totalorder %s27, 0
        %s213 = scalar_select %p212, %s27, 0
        %s214 = smul.addr %s213, 4
        %s215 = scalar_lea.vmem %s1, %s214
        %p216 = scmp.lt.s32.totalorder %s27, 0
        %s217 = scalar_select %p216, %s27, 0
        %s218 = scalar_lea.vmem %s2, %s217
        %s219 = smul.u32 8, %s29
        %s220 = smul.u32 4, %s29
        %s222 = smul.u32 %s28, 10
        %s223 = smul.u32 %s29, 8
        %s224 = sadd.s32 %s222, %s223
        %s225 = smul.u32 %s224, 16
        %vm226 = vcmask 257024
        %227 = vst.msk [vmem:[#allocation2 + $0x50] sm:$0xf] %vm226, 0
        %s228 = sshra.s32 %s225, 3
        %s229 = sand.u32 %s225, 7
        %s230 = smul.addr %s228, 4
        %s231 = scalar_lea.vmem %s0, %s230
        // Predicated region
        $region29: #{tpu_custom_call.1} parent=27 // pred_check
          _
        $region30: #{tpu_custom_call.1} parent=27 // pred_check_branch
          %233 = sbr.rel (0) target = $region32
        $region31: #{tpu_custom_call.1} parent=27 // pred_region
          loop: start=0, step=1, limit=1
          $region33: #{tpu_custom_call.1} parent=31 // loop_pre_header
            _
          $region34: #{tpu_custom_call.1} parent=31 // loop_header
            %s235 = sphi 0, %s239
            %p236 = scmp.ge.s32.totalorder %s235, 1
            %s240 = sphi %s231, %s231
            %s241 = sphi [#allocation2], [#allocation2]
          $region35: #{tpu_custom_call.1} parent=31 // loop_header_branch
            %238 = sbr.rel (%p236) target = $region39
          $region36: #{tpu_custom_call.1} parent=31 // loop_body
            %v242 = vld [vmem:[%s240] sm:$0xff]
            %243 = vst [vmem:[%s241] sm:$0xff] %v242
            %v244 = vld [vmem:[%s240 + $0x8] sm:$0xff]
            %245 = vst [vmem:[%s241 + $0x8] sm:$0xff] %v244
            %v246 = vld [vmem:[%s240 + $0x10] sm:$0xff]
            %247 = vst [vmem:[%s241 + $0x10] sm:$0xff] %v246
            %v248 = vld [vmem:[%s240 + $0x18] sm:$0xff]
            %249 = vst [vmem:[%s241 + $0x18] sm:$0xff] %v248
            %v250 = vld [vmem:[%s240 + $0x20] sm:$0xff]
            %251 = vst [vmem:[%s241 + $0x20] sm:$0xff] %v250
            %v252 = vld [vmem:[%s240 + $0x28] sm:$0xff]
            %253 = vst [vmem:[%s241 + $0x28] sm:$0xff] %v252
            %v254 = vld [vmem:[%s240 + $0x30] sm:$0xff]
            %255 = vst [vmem:[%s241 + $0x30] sm:$0xff] %v254
            %v256 = vld [vmem:[%s240 + $0x38] sm:$0xff]
            %257 = vst [vmem:[%s241 + $0x38] sm:$0xff] %v256
            %v258 = vld [vmem:[%s240 + $0x40] sm:$0xff]
            %259 = vst [vmem:[%s241 + $0x40] sm:$0xff] %v258
            %v260 = vld [vmem:[%s240 + $0x48] sm:$0xff]
            %261 = vst [vmem:[%s241 + $0x48] sm:$0xff] %v260
          $region37: #{tpu_custom_call.1} parent=31 // loop_footer
            %s239 = sadd.s32 1, %s235
          $region38: #{tpu_custom_call.1} parent=31 // loop_footer_branch
            %234 = sbr.rel target = $region34
          $region39: #{tpu_custom_call.1} parent=31 // loop_exit
            _
        $region32: #{tpu_custom_call.1} parent=27 // pred_fallthru
          _
        // Predicated region
        $region40: #{tpu_custom_call.1} parent=27 // pred_check
          _
        $region41: #{tpu_custom_call.1} parent=27 // pred_check_branch
          %263 = sbr.rel target = $region43
        $region42: #{tpu_custom_call.1} parent=27 // pred_region
          _
        $region43: #{tpu_custom_call.1} parent=27 // pred_fallthru
          _
        // Predicated region
        $region44: #{tpu_custom_call.1} parent=27 // pred_check
          _
        $region45: #{tpu_custom_call.1} parent=27 // pred_check_branch
          %266 = sbr.rel (0) target = $region47
        $region46: #{tpu_custom_call.1} parent=27 // pred_region
          %267 = vsyncadd [#allocation4], 1280
        $region47: #{tpu_custom_call.1} parent=27 // pred_fallthru
          _
        %s268 = smul.u32 4, 20
        %s269 = smul.u32 %s268, 1
        %s270 = sshll.u32 %s269, 4
        %271 = dma.done [#allocation4], %s270
        %v272 = vld [vmem:[#allocation2] sm:$0xf]
        %v273 = vld [vmem:[#allocation2 + $0x4] sm:$0xf]
        %v274 = vld [vmem:[#allocation2 + $0x8] sm:$0xf]
        %v275 = vld [vmem:[#allocation2 + $0xc] sm:$0xf]
        %v276 = vld [vmem:[#allocation2 + $0x10] sm:$0xf]
        %v277 = vld [vmem:[#allocation2 + $0x14] sm:$0xf]
        %v278 = vld [vmem:[#allocation2 + $0x18] sm:$0xf]
        %v279 = vld [vmem:[#allocation2 + $0x1c] sm:$0xf]
        %v280 = vld [vmem:[#allocation2 + $0x20] sm:$0xf]
        %v281 = vld [vmem:[#allocation2 + $0x24] sm:$0xf]
        %v282 = vld [vmem:[#allocation2 + $0x28] sm:$0xf]
        %v283 = vld [vmem:[#allocation2 + $0x2c] sm:$0xf]
        %v284 = vld [vmem:[#allocation2 + $0x30] sm:$0xf]
        %v285 = vld [vmem:[#allocation2 + $0x34] sm:$0xf]
        %v286 = vld [vmem:[#allocation2 + $0x38] sm:$0xf]
        %v287 = vld [vmem:[#allocation2 + $0x3c] sm:$0xf]
        %288 = vst.msk [vmem:[#allocation3] sm:$0xf] %vm226, %v272
        %289 = vst.msk [vmem:[#allocation3 + $0xc] sm:$0xf] %vm226, %v273
        %290 = vst.msk [vmem:[#allocation3 + $0x18] sm:$0xf] %vm226, %v274
        %291 = vst.msk [vmem:[#allocation3 + $0x24] sm:$0xf] %vm226, %v275
        %292 = vst.msk [vmem:[#allocation3 + $0x30] sm:$0xf] %vm226, %v276
        %293 = vst.msk [vmem:[#allocation3 + $0x3c] sm:$0xf] %vm226, %v277
        %294 = vst.msk [vmem:[#allocation3 + $0x48] sm:$0xf] %vm226, %v278
        %295 = vst.msk [vmem:[#allocation3 + $0x54] sm:$0xf] %vm226, %v279
        %296 = vst.msk [vmem:[#allocation3 + $0x60] sm:$0xf] %vm226, %v280
        %297 = vst.msk [vmem:[#allocation3 + $0x6c] sm:$0xf] %vm226, %v281
        %298 = vst.msk [vmem:[#allocation3 + $0x78] sm:$0xf] %vm226, %v282
        %299 = vst.msk [vmem:[#allocation3 + $0x84] sm:$0xf] %vm226, %v283
        %300 = vst.msk [vmem:[#allocation3 + $0x90] sm:$0xf] %vm226, %v284
        %301 = vst.msk [vmem:[#allocation3 + $0x9c] sm:$0xf] %vm226, %v285
        %302 = vst.msk [vmem:[#allocation3 + $0xa8] sm:$0xf] %vm226, %v286
        %303 = vst.msk [vmem:[#allocation3 + $0xb4] sm:$0xf] %vm226, %v287
        %v304 = vld [vmem:[#allocation2] sm:$0xf]
        %v305 = vld [vmem:[#allocation2 + $0x4] sm:$0xf]
        %v306 = vld [vmem:[#allocation2 + $0x8] sm:$0xf]
        %v307 = vld [vmem:[#allocation2 + $0xc] sm:$0xf]
        %v308 = vld [vmem:[#allocation2 + $0x10] sm:$0xf]
        %v309 = vld [vmem:[#allocation2 + $0x14] sm:$0xf]
        %v310 = vld [vmem:[#allocation2 + $0x18] sm:$0xf]
        %v311 = vld [vmem:[#allocation2 + $0x1c] sm:$0xf]
        %v312 = vld [vmem:[#allocation2 + $0x20] sm:$0xf]
        %v313 = vld [vmem:[#allocation2 + $0x24] sm:$0xf]
        %v314 = vld [vmem:[#allocation2 + $0x28] sm:$0xf]
        %v315 = vld [vmem:[#allocation2 + $0x2c] sm:$0xf]
        %v316 = vld [vmem:[#allocation2 + $0x30] sm:$0xf]
        %v317 = vld [vmem:[#allocation2 + $0x34] sm:$0xf]
        %v318 = vld [vmem:[#allocation2 + $0x38] sm:$0xf]
        %v319 = vld [vmem:[#allocation2 + $0x3c] sm:$0xf]
        %v320 = vld [vmem:[#allocation2 + $0x40] sm:$0x1]
        %vm321 = vsmask.f32 3328
        %vm322 = vsmask.f32 7440
        %vm323 = vmor %vm321, %vm322
        %v325 = vshrl.u32 %v304, 16
        %v327 = vrot.slane %v325, 4
        %v328 = vshll.u32 %v304, 16
        %v330 = vrot.slane %v328, 5
        %v331 = vor.u32 %v327, %v330
        %v332 = vrot.slane %v331, 4
        %v334 = vshll.u32 %v305, 16
        %v336 = vrot.slane %v334, 5
        %v337 = vsel %vm323, %v332, %v336
        %v338 = vshrl.u32 %v305, 16
        %v340 = vrot.slane %v338, 4
        %v341 = vor.u32 %v340, %v336
        %v342 = vrot.slane %v341, 4
        %v344 = vshll.u32 %v306, 16
        %v346 = vrot.slane %v344, 5
        %v347 = vsel %vm323, %v342, %v346
        %v348 = vshrl.u32 %v306, 16
        %v350 = vrot.slane %v348, 4
        %v351 = vor.u32 %v350, %v346
        %v352 = vrot.slane %v351, 4
        %v354 = vshll.u32 %v307, 16
        %v356 = vrot.slane %v354, 5
        %v357 = vsel %vm323, %v352, %v356
        %v358 = vshrl.u32 %v307, 16
        %v360 = vrot.slane %v358, 4
        %v361 = vor.u32 %v360, %v356
        %v362 = vrot.slane %v361, 4
        %v364 = vshll.u32 %v308, 16
        %v366 = vrot.slane %v364, 5
        %v367 = vsel %vm323, %v362, %v366
        %v368 = vshrl.u32 %v308, 16
        %v370 = vrot.slane %v368, 4
        %v371 = vor.u32 %v370, %v366
        %v372 = vrot.slane %v371, 4
        %v374 = vshll.u32 %v309, 16
        %v376 = vrot.slane %v374, 5
        %v377 = vsel %vm323, %v372, %v376
        %v378 = vshrl.u32 %v309, 16
        %v380 = vrot.slane %v378, 4
        %v381 = vor.u32 %v380, %v376
        %v382 = vrot.slane %v381, 4
        %v384 = vshll.u32 %v310, 16
        %v386 = vrot.slane %v384, 5
        %v387 = vsel %vm323, %v382, %v386
        %v388 = vshrl.u32 %v310, 16
        %v390 = vrot.slane %v388, 4
        %v391 = vor.u32 %v390, %v386
        %v392 = vrot.slane %v391, 4
        %v394 = vshll.u32 %v311, 16
        %v396 = vrot.slane %v394, 5
        %v397 = vsel %vm323, %v392, %v396
        %v398 = vshrl.u32 %v311, 16
        %v400 = vrot.slane %v398, 4
        %v401 = vor.u32 %v400, %v396
        %v402 = vrot.slane %v401, 4
        %v404 = vshll.u32 %v312, 16
        %v406 = vrot.slane %v404, 5
        %v407 = vsel %vm323, %v402, %v406
        %v408 = vshrl.u32 %v312, 16
        %v410 = vrot.slane %v408, 4
        %v411 = vor.u32 %v410, %v406
        %v412 = vrot.slane %v411, 4
        %v414 = vshll.u32 %v313, 16
        %v416 = vrot.slane %v414, 5
        %v417 = vsel %vm323, %v412, %v416
        %v418 = vshrl.u32 %v313, 16
        %v420 = vrot.slane %v418, 4
        %v421 = vor.u32 %v420, %v416
        %v422 = vrot.slane %v421, 4
        %v424 = vshll.u32 %v314, 16
        %v426 = vrot.slane %v424, 5
        %v427 = vsel %vm323, %v422, %v426
        %v428 = vshrl.u32 %v314, 16
        %v430 = vrot.slane %v428, 4
        %v431 = vor.u32 %v430, %v426
        %v432 = vrot.slane %v431, 4
        %v434 = vshll.u32 %v315, 16
        %v436 = vrot.slane %v434, 5
        %v437 = vsel %vm323, %v432, %v436
        %v438 = vshrl.u32 %v315, 16
        %v440 = vrot.slane %v438, 4
        %v441 = vor.u32 %v440, %v436
        %v442 = vrot.slane %v441, 4
        %v444 = vshll.u32 %v316, 16
        %v446 = vrot.slane %v444, 5
        %v447 = vsel %vm323, %v442, %v446
        %v448 = vshrl.u32 %v316, 16
        %v450 = vrot.slane %v448, 4
        %v451 = vor.u32 %v450, %v446
        %v452 = vrot.slane %v451, 4
        %v454 = vshll.u32 %v317, 16
        %v456 = vrot.slane %v454, 5
        %v457 = vsel %vm323, %v452, %v456
        %v458 = vshrl.u32 %v317, 16
        %v460 = vrot.slane %v458, 4
        %v461 = vor.u32 %v460, %v456
        %v462 = vrot.slane %v461, 4
        %v464 = vshll.u32 %v318, 16
        %v466 = vrot.slane %v464, 5
        %v467 = vsel %vm323, %v462, %v466
        %v468 = vshrl.u32 %v318, 16
        %v470 = vrot.slane %v468, 4
        %v471 = vor.u32 %v470, %v466
        %v472 = vrot.slane %v471, 4
        %v474 = vshll.u32 %v319, 16
        %v476 = vrot.slane %v474, 5
        %v477 = vsel %vm323, %v472, %v476
        %v478 = vshrl.u32 %v319, 16
        %v480 = vrot.slane %v478, 4
        %v481 = vor.u32 %v480, %v476
        %v482 = vrot.slane %v481, 4
        %v484 = vshll.u32 %v320, 16
        %v486 = vrot.slane %v484, 5
        %v487 = vsel %vm323, %v482, %v486
        %488 = vrot.lane.b32.xlu0 %v337, 32
        %v489 = vpop.permute.xlu0 %488
        %490 = vrot.lane.b32.xlu0 %v347, 32
        %v491 = vpop.permute.xlu0 %490
        %492 = vrot.lane.b32.xlu0 %v357, 32
        %v493 = vpop.permute.xlu0 %492
        %494 = vrot.lane.b32.xlu0 %v367, 32
        %v495 = vpop.permute.xlu0 %494
        %496 = vrot.lane.b32.xlu0 %v377, 32
        %v497 = vpop.permute.xlu0 %496
        %498 = vrot.lane.b32.xlu0 %v387, 32
        %v499 = vpop.permute.xlu0 %498
        %500 = vrot.lane.b32.xlu0 %v397, 32
        %v501 = vpop.permute.xlu0 %500
        %502 = vrot.lane.b32.xlu0 %v407, 32
        %v503 = vpop.permute.xlu0 %502
        %504 = vrot.lane.b32.xlu0 %v417, 32
        %v505 = vpop.permute.xlu0 %504
        %506 = vrot.lane.b32.xlu0 %v427, 32
        %v507 = vpop.permute.xlu0 %506
        %508 = vrot.lane.b32.xlu0 %v437, 32
        %v509 = vpop.permute.xlu0 %508
        %510 = vrot.lane.b32.xlu0 %v447, 32
        %v511 = vpop.permute.xlu0 %510
        %512 = vrot.lane.b32.xlu0 %v457, 32
        %v513 = vpop.permute.xlu0 %512
        %514 = vrot.lane.b32.xlu0 %v467, 32
        %v515 = vpop.permute.xlu0 %514
        %516 = vrot.lane.b32.xlu0 %v477, 32
        %v517 = vpop.permute.xlu0 %516
        %518 = vrot.lane.b32.xlu0 %v487, 32
        %v519 = vpop.permute.xlu0 %518
        %vm536 = vcmask 519424
        %537 = vst.msk [vmem:[#allocation3] sm:$0xf] %vm536, %v489
        %538 = vst.msk [vmem:[#allocation3 + $0xc] sm:$0xf] %vm536, %v491
        %539 = vst.msk [vmem:[#allocation3 + $0x18] sm:$0xf] %vm536, %v493
        %540 = vst.msk [vmem:[#allocation3 + $0x24] sm:$0xf] %vm536, %v495
        %541 = vst.msk [vmem:[#allocation3 + $0x30] sm:$0xf] %vm536, %v497
        %542 = vst.msk [vmem:[#allocation3 + $0x3c] sm:$0xf] %vm536, %v499
        %543 = vst.msk [vmem:[#allocation3 + $0x48] sm:$0xf] %vm536, %v501
        %544 = vst.msk [vmem:[#allocation3 + $0x54] sm:$0xf] %vm536, %v503
        %545 = vst.msk [vmem:[#allocation3 + $0x60] sm:$0xf] %vm536, %v505
        %546 = vst.msk [vmem:[#allocation3 + $0x6c] sm:$0xf] %vm536, %v507
        %547 = vst.msk [vmem:[#allocation3 + $0x78] sm:$0xf] %vm536, %v509
        %548 = vst.msk [vmem:[#allocation3 + $0x84] sm:$0xf] %vm536, %v511
        %549 = vst.msk [vmem:[#allocation3 + $0x90] sm:$0xf] %vm536, %v513
        %550 = vst.msk [vmem:[#allocation3 + $0x9c] sm:$0xf] %vm536, %v515
        %551 = vst.msk [vmem:[#allocation3 + $0xa8] sm:$0xf] %vm536, %v517
        %552 = vst.msk [vmem:[#allocation3 + $0xb4] sm:$0xf] %vm536, %v519
        %v553 = vld [vmem:[#allocation2] sm:$0xe]
        %v554 = vld [vmem:[#allocation2 + $0x4] sm:$0xf]
        %v555 = vld [vmem:[#allocation2 + $0x8] sm:$0xf]
        %v556 = vld [vmem:[#allocation2 + $0xc] sm:$0xf]
        %v557 = vld [vmem:[#allocation2 + $0x10] sm:$0xf]
        %v558 = vld [vmem:[#allocation2 + $0x14] sm:$0xf]
        %v559 = vld [vmem:[#allocation2 + $0x18] sm:$0xf]
        %v560 = vld [vmem:[#allocation2 + $0x1c] sm:$0xf]
        %v561 = vld [vmem:[#allocation2 + $0x20] sm:$0xf]
        %v562 = vld [vmem:[#allocation2 + $0x24] sm:$0xf]
        %v563 = vld [vmem:[#allocation2 + $0x28] sm:$0xf]
        %v564 = vld [vmem:[#allocation2 + $0x2c] sm:$0xf]
        %v565 = vld [vmem:[#allocation2 + $0x30] sm:$0xf]
        %v566 = vld [vmem:[#allocation2 + $0x34] sm:$0xf]
        %v567 = vld [vmem:[#allocation2 + $0x38] sm:$0xf]
        %v568 = vld [vmem:[#allocation2 + $0x3c] sm:$0xf]
        %v569 = vld [vmem:[#allocation2 + $0x40] sm:$0x1]
        %vm587 = vcmask 1042432
        %vm588 = vcmask 1046532
        %vm589 = vmor %vm587, %vm588
        %v590 = vrot.slane %v553, 5
        %v591 = vrot.slane %v590, 4
        %v592 = vrot.slane %v554, 5
        %v593 = vsel %vm589, %v591, %v592
        %v594 = vrot.slane %v592, 4
        %v595 = vrot.slane %v555, 5
        %v596 = vsel %vm589, %v594, %v595
        %v597 = vrot.slane %v595, 4
        %v598 = vrot.slane %v556, 5
        %v599 = vsel %vm589, %v597, %v598
        %v600 = vrot.slane %v598, 4
        %v601 = vrot.slane %v557, 5
        %v602 = vsel %vm589, %v600, %v601
        %v603 = vrot.slane %v601, 4
        %v604 = vrot.slane %v558, 5
        %v605 = vsel %vm589, %v603, %v604
        %v606 = vrot.slane %v604, 4
        %v607 = vrot.slane %v559, 5
        %v608 = vsel %vm589, %v606, %v607
        %v609 = vrot.slane %v607, 4
        %v610 = vrot.slane %v560, 5
        %v611 = vsel %vm589, %v609, %v610
        %v612 = vrot.slane %v610, 4
        %v613 = vrot.slane %v561, 5
        %v614 = vsel %vm589, %v612, %v613
        %v615 = vrot.slane %v613, 4
        %v616 = vrot.slane %v562, 5
        %v617 = vsel %vm589, %v615, %v616
        %v618 = vrot.slane %v616, 4
        %v619 = vrot.slane %v563, 5
        %v620 = vsel %vm589, %v618, %v619
        %v621 = vrot.slane %v619, 4
        %v622 = vrot.slane %v564, 5
        %v623 = vsel %vm589, %v621, %v622
        %v624 = vrot.slane %v622, 4
        %v625 = vrot.slane %v565, 5
        %v626 = vsel %vm589, %v624, %v625
        %v627 = vrot.slane %v625, 4
        %v628 = vrot.slane %v566, 5
        %v629 = vsel %vm589, %v627, %v628
        %v630 = vrot.slane %v628, 4
        %v631 = vrot.slane %v567, 5
        %v632 = vsel %vm589, %v630, %v631
        %v633 = vrot.slane %v631, 4
        %v634 = vrot.slane %v568, 5
        %v635 = vsel %vm589, %v633, %v634
        %v636 = vrot.slane %v634, 4
        %v637 = vrot.slane %v569, 5
        %v638 = vsel %vm589, %v636, %v637
        %639 = vrot.lane.b32.xlu0 %v593, 64
        %v640 = vpop.permute.xlu0 %639
        %641 = vrot.lane.b32.xlu0 %v596, 64
        %v642 = vpop.permute.xlu0 %641
        %643 = vrot.lane.b32.xlu0 %v599, 64
        %v644 = vpop.permute.xlu0 %643
        %645 = vrot.lane.b32.xlu0 %v602, 64
        %v646 = vpop.permute.xlu0 %645
        %647 = vrot.lane.b32.xlu0 %v605, 64
        %v648 = vpop.permute.xlu0 %647
        %649 = vrot.lane.b32.xlu0 %v608, 64
        %v650 = vpop.permute.xlu0 %649
        %651 = vrot.lane.b32.xlu0 %v611, 64
        %v652 = vpop.permute.xlu0 %651
        %653 = vrot.lane.b32.xlu0 %v614, 64
        %v654 = vpop.permute.xlu0 %653
        %655 = vrot.lane.b32.xlu0 %v617, 64
        %v656 = vpop.permute.xlu0 %655
        %657 = vrot.lane.b32.xlu0 %v620, 64
        %v658 = vpop.permute.xlu0 %657
        %659 = vrot.lane.b32.xlu0 %v623, 64
        %v660 = vpop.permute.xlu0 %659
        %661 = vrot.lane.b32.xlu0 %v626, 64
        %v662 = vpop.permute.xlu0 %661
        %663 = vrot.lane.b32.xlu0 %v629, 64
        %v664 = vpop.permute.xlu0 %663
        %665 = vrot.lane.b32.xlu0 %v632, 64
        %v666 = vpop.permute.xlu0 %665
        %667 = vrot.lane.b32.xlu0 %v635, 64
        %v668 = vpop.permute.xlu0 %667
        %669 = vrot.lane.b32.xlu0 %v638, 64
        %v670 = vpop.permute.xlu0 %669
        %vm687 = vcmask 781824
        %688 = vst.msk [vmem:[#allocation3] sm:$0xf] %vm687, %v640
        %689 = vst.msk [vmem:[#allocation3 + $0xc] sm:$0xf] %vm687, %v642
        %690 = vst.msk [vmem:[#allocation3 + $0x18] sm:$0xf] %vm687, %v644
        %691 = vst.msk [vmem:[#allocation3 + $0x24] sm:$0xf] %vm687, %v646
        %692 = vst.msk [vmem:[#allocation3 + $0x30] sm:$0xf] %vm687, %v648
        %693 = vst.msk [vmem:[#allocation3 + $0x3c] sm:$0xf] %vm687, %v650
        %694 = vst.msk [vmem:[#allocation3 + $0x48] sm:$0xf] %vm687, %v652
        %695 = vst.msk [vmem:[#allocation3 + $0x54] sm:$0xf] %vm687, %v654
        %696 = vst.msk [vmem:[#allocation3 + $0x60] sm:$0xf] %vm687, %v656
        %697 = vst.msk [vmem:[#allocation3 + $0x6c] sm:$0xf] %vm687, %v658
        %698 = vst.msk [vmem:[#allocation3 + $0x78] sm:$0xf] %vm687, %v660
        %699 = vst.msk [vmem:[#allocation3 + $0x84] sm:$0xf] %vm687, %v662
        %700 = vst.msk [vmem:[#allocation3 + $0x90] sm:$0xf] %vm687, %v664
        %701 = vst.msk [vmem:[#allocation3 + $0x9c] sm:$0xf] %vm687, %v666
        %702 = vst.msk [vmem:[#allocation3 + $0xa8] sm:$0xf] %vm687, %v668
        %703 = vst.msk [vmem:[#allocation3 + $0xb4] sm:$0xf] %vm687, %v670
        %v704 = vld [vmem:[#allocation2 + $0x8] sm:$0xf]
        %v705 = vld [vmem:[#allocation2 + $0xc] sm:$0xf]
        %v706 = vld [vmem:[#allocation2 + $0x10] sm:$0xf]
        %v707 = vld [vmem:[#allocation2 + $0x14] sm:$0xf]
        %v708 = vld [vmem:[#allocation2 + $0x18] sm:$0xf]
        %v709 = vld [vmem:[#allocation2 + $0x1c] sm:$0xf]
        %v710 = vld [vmem:[#allocation2 + $0x20] sm:$0xf]
        %v711 = vld [vmem:[#allocation2 + $0x24] sm:$0xf]
        %v712 = vld [vmem:[#allocation2 + $0x28] sm:$0xf]
        %v713 = vld [vmem:[#allocation2 + $0x2c] sm:$0xf]
        %v714 = vld [vmem:[#allocation2 + $0x30] sm:$0xf]
        %v715 = vld [vmem:[#allocation2 + $0x34] sm:$0xf]
        %v716 = vld [vmem:[#allocation2 + $0x38] sm:$0xf]
        %v717 = vld [vmem:[#allocation2 + $0x3c] sm:$0xf]
        %v718 = vld [vmem:[#allocation2 + $0x40] sm:$0xf]
        %v719 = vld [vmem:[#allocation2 + $0x44] sm:$0xf]
        %736 = vrot.lane.b32.xlu0 %v704, 96
        %v737 = vpop.permute.xlu0 %736
        %738 = vrot.lane.b32.xlu0 %v705, 96
        %v739 = vpop.permute.xlu0 %738
        %740 = vrot.lane.b32.xlu0 %v706, 96
        %v741 = vpop.permute.xlu0 %740
        %742 = vrot.lane.b32.xlu0 %v707, 96
        %v743 = vpop.permute.xlu0 %742
        %744 = vrot.lane.b32.xlu0 %v708, 96
        %v745 = vpop.permute.xlu0 %744
        %746 = vrot.lane.b32.xlu0 %v709, 96
        %v747 = vpop.permute.xlu0 %746
        %748 = vrot.lane.b32.xlu0 %v710, 96
        %v749 = vpop.permute.xlu0 %748
        %750 = vrot.lane.b32.xlu0 %v711, 96
        %v751 = vpop.permute.xlu0 %750
        %752 = vrot.lane.b32.xlu0 %v712, 96
        %v753 = vpop.permute.xlu0 %752
        %754 = vrot.lane.b32.xlu0 %v713, 96
        %v755 = vpop.permute.xlu0 %754
        %756 = vrot.lane.b32.xlu0 %v714, 96
        %v757 = vpop.permute.xlu0 %756
        %758 = vrot.lane.b32.xlu0 %v715, 96
        %v759 = vpop.permute.xlu0 %758
        %760 = vrot.lane.b32.xlu0 %v716, 96
        %v761 = vpop.permute.xlu0 %760
        %762 = vrot.lane.b32.xlu0 %v717, 96
        %v763 = vpop.permute.xlu0 %762
        %764 = vrot.lane.b32.xlu0 %v718, 96
        %v765 = vpop.permute.xlu0 %764
        %766 = vrot.lane.b32.xlu0 %v719, 96
        %v767 = vpop.permute.xlu0 %766
        %vm784 = vcmask 1044224
        %785 = vst.msk [vmem:[#allocation3] sm:$0xf] %vm784, %v737
        %786 = vst.msk [vmem:[#allocation3 + $0xc] sm:$0xf] %vm784, %v739
        %787 = vst.msk [vmem:[#allocation3 + $0x18] sm:$0xf] %vm784, %v741
        %788 = vst.msk [vmem:[#allocation3 + $0x24] sm:$0xf] %vm784, %v743
        %789 = vst.msk [vmem:[#allocation3 + $0x30] sm:$0xf] %vm784, %v745
        %790 = vst.msk [vmem:[#allocation3 + $0x3c] sm:$0xf] %vm784, %v747
        %791 = vst.msk [vmem:[#allocation3 + $0x48] sm:$0xf] %vm784, %v749
        %792 = vst.msk [vmem:[#allocation3 + $0x54] sm:$0xf] %vm784, %v751
        %793 = vst.msk [vmem:[#allocation3 + $0x60] sm:$0xf] %vm784, %v753
        %794 = vst.msk [vmem:[#allocation3 + $0x6c] sm:$0xf] %vm784, %v755
        %795 = vst.msk [vmem:[#allocation3 + $0x78] sm:$0xf] %vm784, %v757
        %796 = vst.msk [vmem:[#allocation3 + $0x84] sm:$0xf] %vm784, %v759
        %797 = vst.msk [vmem:[#allocation3 + $0x90] sm:$0xf] %vm784, %v761
        %798 = vst.msk [vmem:[#allocation3 + $0x9c] sm:$0xf] %vm784, %v763
        %799 = vst.msk [vmem:[#allocation3 + $0xa8] sm:$0xf] %vm784, %v765
        %800 = vst.msk [vmem:[#allocation3 + $0xb4] sm:$0xf] %vm784, %v767
        %v801 = vld [vmem:[#allocation2 + $0x8] sm:$0xf]
        %v802 = vld [vmem:[#allocation2 + $0xc] sm:$0xf]
        %v803 = vld [vmem:[#allocation2 + $0x10] sm:$0xf]
        %v804 = vld [vmem:[#allocation2 + $0x14] sm:$0xf]
        %v805 = vld [vmem:[#allocation2 + $0x18] sm:$0xf]
        %v806 = vld [vmem:[#allocation2 + $0x1c] sm:$0xf]
        %v807 = vld [vmem:[#allocation2 + $0x20] sm:$0xf]
        %v808 = vld [vmem:[#allocation2 + $0x24] sm:$0xf]
        %v809 = vld [vmem:[#allocation2 + $0x28] sm:$0xf]
        %v810 = vld [vmem:[#allocation2 + $0x2c] sm:$0xf]
        %v811 = vld [vmem:[#allocation2 + $0x30] sm:$0xf]
        %v812 = vld [vmem:[#allocation2 + $0x34] sm:$0xf]
        %v813 = vld [vmem:[#allocation2 + $0x38] sm:$0xf]
        %v814 = vld [vmem:[#allocation2 + $0x3c] sm:$0xf]
        %v815 = vld [vmem:[#allocation2 + $0x40] sm:$0xf]
        %v816 = vld [vmem:[#allocation2 + $0x44] sm:$0xf]
        %v817 = vld [vmem:[#allocation2 + $0x48] sm:$0x1]
        %v819 = vshrl.u32 %v801, 16
        %v821 = vrot.slane %v819, 4
        %v822 = vshll.u32 %v801, 16
        %v824 = vrot.slane %v822, 5
        %v825 = vor.u32 %v821, %v824
        %v826 = vrot.slane %v825, 4
        %v828 = vshll.u32 %v802, 16
        %v830 = vrot.slane %v828, 5
        %v831 = vsel %vm323, %v826, %v830
        %v832 = vshrl.u32 %v802, 16
        %v834 = vrot.slane %v832, 4
        %v835 = vor.u32 %v834, %v830
        %v836 = vrot.slane %v835, 4
        %v838 = vshll.u32 %v803, 16
        %v840 = vrot.slane %v838, 5
        %v841 = vsel %vm323, %v836, %v840
        %v842 = vshrl.u32 %v803, 16
        %v844 = vrot.slane %v842, 4
        %v845 = vor.u32 %v844, %v840
        %v846 = vrot.slane %v845, 4
        %v848 = vshll.u32 %v804, 16
        %v850 = vrot.slane %v848, 5
        %v851 = vsel %vm323, %v846, %v850
        %v852 = vshrl.u32 %v804, 16
        %v854 = vrot.slane %v852, 4
        %v855 = vor.u32 %v854, %v850
        %v856 = vrot.slane %v855, 4
        %v858 = vshll.u32 %v805, 16
        %v860 = vrot.slane %v858, 5
        %v861 = vsel %vm323, %v856, %v860
        %v862 = vshrl.u32 %v805, 16
        %v864 = vrot.slane %v862, 4
        %v865 = vor.u32 %v864, %v860
        %v866 = vrot.slane %v865, 4
        %v868 = vshll.u32 %v806, 16
        %v870 = vrot.slane %v868, 5
        %v871 = vsel %vm323, %v866, %v870
        %v872 = vshrl.u32 %v806, 16
        %v874 = vrot.slane %v872, 4
        %v875 = vor.u32 %v874, %v870
        %v876 = vrot.slane %v875, 4
        %v878 = vshll.u32 %v807, 16
        %v880 = vrot.slane %v878, 5
        %v881 = vsel %vm323, %v876, %v880
        %v882 = vshrl.u32 %v807, 16
        %v884 = vrot.slane %v882, 4
        %v885 = vor.u32 %v884, %v880
        %v886 = vrot.slane %v885, 4
        %v888 = vshll.u32 %v808, 16
        %v890 = vrot.slane %v888, 5
        %v891 = vsel %vm323, %v886, %v890
        %v892 = vshrl.u32 %v808, 16
        %v894 = vrot.slane %v892, 4
        %v895 = vor.u32 %v894, %v890
        %v896 = vrot.slane %v895, 4
        %v898 = vshll.u32 %v809, 16
        %v900 = vrot.slane %v898, 5
        %v901 = vsel %vm323, %v896, %v900
        %v902 = vshrl.u32 %v809, 16
        %v904 = vrot.slane %v902, 4
        %v905 = vor.u32 %v904, %v900
        %v906 = vrot.slane %v905, 4
        %v908 = vshll.u32 %v810, 16
        %v910 = vrot.slane %v908, 5
        %v911 = vsel %vm323, %v906, %v910
        %v912 = vshrl.u32 %v810, 16
        %v914 = vrot.slane %v912, 4
        %v915 = vor.u32 %v914, %v910
        %v916 = vrot.slane %v915, 4
        %v918 = vshll.u32 %v811, 16
        %v920 = vrot.slane %v918, 5
        %v921 = vsel %vm323, %v916, %v920
        %v922 = vshrl.u32 %v811, 16
        %v924 = vrot.slane %v922, 4
        %v925 = vor.u32 %v924, %v920
        %v926 = vrot.slane %v925, 4
        %v928 = vshll.u32 %v812, 16
        %v930 = vrot.slane %v928, 5
        %v931 = vsel %vm323, %v926, %v930
        %v932 = vshrl.u32 %v812, 16
        %v934 = vrot.slane %v932, 4
        %v935 = vor.u32 %v934, %v930
        %v936 = vrot.slane %v935, 4
        %v938 = vshll.u32 %v813, 16
        %v940 = vrot.slane %v938, 5
        %v941 = vsel %vm323, %v936, %v940
        %v942 = vshrl.u32 %v813, 16
        %v944 = vrot.slane %v942, 4
        %v945 = vor.u32 %v944, %v940
        %v946 = vrot.slane %v945, 4
        %v948 = vshll.u32 %v814, 16
        %v950 = vrot.slane %v948, 5
        %v951 = vsel %vm323, %v946, %v950
        %v952 = vshrl.u32 %v814, 16
        %v954 = vrot.slane %v952, 4
        %v955 = vor.u32 %v954, %v950
        %v956 = vrot.slane %v955, 4
        %v958 = vshll.u32 %v815, 16
        %v960 = vrot.slane %v958, 5
        %v961 = vsel %vm323, %v956, %v960
        %v962 = vshrl.u32 %v815, 16
        %v964 = vrot.slane %v962, 4
        %v965 = vor.u32 %v964, %v960
        %v966 = vrot.slane %v965, 4
        %v968 = vshll.u32 %v816, 16
        %v970 = vrot.slane %v968, 5
        %v971 = vsel %vm323, %v966, %v970
        %v972 = vshrl.u32 %v816, 16
        %v974 = vrot.slane %v972, 4
        %v975 = vor.u32 %v974, %v970
        %v976 = vrot.slane %v975, 4
        %v978 = vshll.u32 %v817, 16
        %v980 = vrot.slane %v978, 5
        %v981 = vsel %vm323, %v976, %v980
        %998 = vst.msk [vmem:[#allocation3 + $0x4] sm:$0xf] %vm226, %v831
        %999 = vst.msk [vmem:[#allocation3 + $0x10] sm:$0xf] %vm226, %v841
        %1000 = vst.msk [vmem:[#allocation3 + $0x1c] sm:$0xf] %vm226, %v851
        %1001 = vst.msk [vmem:[#allocation3 + $0x28] sm:$0xf] %vm226, %v861
        %1002 = vst.msk [vmem:[#allocation3 + $0x34] sm:$0xf] %vm226, %v871
        %1003 = vst.msk [vmem:[#allocation3 + $0x40] sm:$0xf] %vm226, %v881
        %1004 = vst.msk [vmem:[#allocation3 + $0x4c] sm:$0xf] %vm226, %v891
        %1005 = vst.msk [vmem:[#allocation3 + $0x58] sm:$0xf] %vm226, %v901
        %1006 = vst.msk [vmem:[#allocation3 + $0x64] sm:$0xf] %vm226, %v911
        %1007 = vst.msk [vmem:[#allocation3 + $0x70] sm:$0xf] %vm226, %v921
        %1008 = vst.msk [vmem:[#allocation3 + $0x7c] sm:$0xf] %vm226, %v931
        %1009 = vst.msk [vmem:[#allocation3 + $0x88] sm:$0xf] %vm226, %v941
        %1010 = vst.msk [vmem:[#allocation3 + $0x94] sm:$0xf] %vm226, %v951
        %1011 = vst.msk [vmem:[#allocation3 + $0xa0] sm:$0xf] %vm226, %v961
        %1012 = vst.msk [vmem:[#allocation3 + $0xac] sm:$0xf] %vm226, %v971
        %1013 = vst.msk [vmem:[#allocation3 + $0xb8] sm:$0xf] %vm226, %v981
        %v1014 = vld [vmem:[#allocation2 + $0x8] sm:$0xe]
        %v1015 = vld [vmem:[#allocation2 + $0xc] sm:$0xf]
        %v1016 = vld [vmem:[#allocation2 + $0x10] sm:$0xf]
        %v1017 = vld [vmem:[#allocation2 + $0x14] sm:$0xf]
        %v1018 = vld [vmem:[#allocation2 + $0x18] sm:$0xf]
        %v1019 = vld [vmem:[#allocation2 + $0x1c] sm:$0xf]
        %v1020 = vld [vmem:[#allocation2 + $0x20] sm:$0xf]
        %v1021 = vld [vmem:[#allocation2 + $0x24] sm:$0xf]
        %v1022 = vld [vmem:[#allocation2 + $0x28] sm:$0xf]
        %v1023 = vld [vmem:[#allocation2 + $0x2c] sm:$0xf]
        %v1024 = vld [vmem:[#allocation2 + $0x30] sm:$0xf]
        %v1025 = vld [vmem:[#allocation2 + $0x34] sm:$0xf]
        %v1026 = vld [vmem:[#allocation2 + $0x38] sm:$0xf]
        %v1027 = vld [vmem:[#allocation2 + $0x3c] sm:$0xf]
        %v1028 = vld [vmem:[#allocation2 + $0x40] sm:$0xf]
        %v1029 = vld [vmem:[#allocation2 + $0x44] sm:$0xf]
        %v1030 = vld [vmem:[#allocation2 + $0x48] sm:$0x1]
        %v1048 = vrot.slane %v1014, 5
        %v1049 = vrot.slane %v1048, 4
        %v1050 = vrot.slane %v1015, 5
        %v1051 = vsel %vm589, %v1049, %v1050
        %v1052 = vrot.slane %v1050, 4
        %v1053 = vrot.slane %v1016, 5
        %v1054 = vsel %vm589, %v1052, %v1053
        %v1055 = vrot.slane %v1053, 4
        %v1056 = vrot.slane %v1017, 5
        %v1057 = vsel %vm589, %v1055, %v1056
        %v1058 = vrot.slane %v1056, 4
        %v1059 = vrot.slane %v1018, 5
        %v1060 = vsel %vm589, %v1058, %v1059
        %v1061 = vrot.slane %v1059, 4
        %v1062 = vrot.slane %v1019, 5
        %v1063 = vsel %vm589, %v1061, %v1062
        %v1064 = vrot.slane %v1062, 4
        %v1065 = vrot.slane %v1020, 5
        %v1066 = vsel %vm589, %v1064, %v1065
        %v1067 = vrot.slane %v1065, 4
        %v1068 = vrot.slane %v1021, 5
        %v1069 = vsel %vm589, %v1067, %v1068
        %v1070 = vrot.slane %v1068, 4
        %v1071 = vrot.slane %v1022, 5
        %v1072 = vsel %vm589, %v1070, %v1071
        %v1073 = vrot.slane %v1071, 4
        %v1074 = vrot.slane %v1023, 5
        %v1075 = vsel %vm589, %v1073, %v1074
        %v1076 = vrot.slane %v1074, 4
        %v1077 = vrot.slane %v1024, 5
        %v1078 = vsel %vm589, %v1076, %v1077
        %v1079 = vrot.slane %v1077, 4
        %v1080 = vrot.slane %v1025, 5
        %v1081 = vsel %vm589, %v1079, %v1080
        %v1082 = vrot.slane %v1080, 4
        %v1083 = vrot.slane %v1026, 5
        %v1084 = vsel %vm589, %v1082, %v1083
        %v1085 = vrot.slane %v1083, 4
        %v1086 = vrot.slane %v1027, 5
        %v1087 = vsel %vm589, %v1085, %v1086
        %v1088 = vrot.slane %v1086, 4
        %v1089 = vrot.slane %v1028, 5
        %v1090 = vsel %vm589, %v1088, %v1089
        %v1091 = vrot.slane %v1089, 4
        %v1092 = vrot.slane %v1029, 5
        %v1093 = vsel %vm589, %v1091, %v1092
        %v1094 = vrot.slane %v1092, 4
        %v1095 = vrot.slane %v1030, 5
        %v1096 = vsel %vm589, %v1094, %v1095
        %1097 = vrot.lane.b32.xlu0 %v1051, 32
        %v1098 = vpop.permute.xlu0 %1097
        %1099 = vrot.lane.b32.xlu0 %v1054, 32
        %v1100 = vpop.permute.xlu0 %1099
        %1101 = vrot.lane.b32.xlu0 %v1057, 32
        %v1102 = vpop.permute.xlu0 %1101
        %1103 = vrot.lane.b32.xlu0 %v1060, 32
        %v1104 = vpop.permute.xlu0 %1103
        %1105 = vrot.lane.b32.xlu0 %v1063, 32
        %v1106 = vpop.permute.xlu0 %1105
        %1107 = vrot.lane.b32.xlu0 %v1066, 32
        %v1108 = vpop.permute.xlu0 %1107
        %1109 = vrot.lane.b32.xlu0 %v1069, 32
        %v1110 = vpop.permute.xlu0 %1109
        %1111 = vrot.lane.b32.xlu0 %v1072, 32
        %v1112 = vpop.permute.xlu0 %1111
        %1113 = vrot.lane.b32.xlu0 %v1075, 32
        %v1114 = vpop.permute.xlu0 %1113
        %1115 = vrot.lane.b32.xlu0 %v1078, 32
        %v1116 = vpop.permute.xlu0 %1115
        %1117 = vrot.lane.b32.xlu0 %v1081, 32
        %v1118 = vpop.permute.xlu0 %1117
        %1119 = vrot.lane.b32.xlu0 %v1084, 32
        %v1120 = vpop.permute.xlu0 %1119
        %1121 = vrot.lane.b32.xlu0 %v1087, 32
        %v1122 = vpop.permute.xlu0 %1121
        %1123 = vrot.lane.b32.xlu0 %v1090, 32
        %v1124 = vpop.permute.xlu0 %1123
        %1125 = vrot.lane.b32.xlu0 %v1093, 32
        %v1126 = vpop.permute.xlu0 %1125
        %1127 = vrot.lane.b32.xlu0 %v1096, 32
        %v1128 = vpop.permute.xlu0 %1127
        %1145 = vst.msk [vmem:[#allocation3 + $0x4] sm:$0xf] %vm536, %v1098
        %1146 = vst.msk [vmem:[#allocation3 + $0x10] sm:$0xf] %vm536, %v1100
        %1147 = vst.msk [vmem:[#allocation3 + $0x1c] sm:$0xf] %vm536, %v1102
        %1148 = vst.msk [vmem:[#allocation3 + $0x28] sm:$0xf] %vm536, %v1104
        %1149 = vst.msk [vmem:[#allocation3 + $0x34] sm:$0xf] %vm536, %v1106
        %1150 = vst.msk [vmem:[#allocation3 + $0x40] sm:$0xf] %vm536, %v1108
        %1151 = vst.msk [vmem:[#allocation3 + $0x4c] sm:$0xf] %vm536, %v1110
        %1152 = vst.msk [vmem:[#allocation3 + $0x58] sm:$0xf] %vm536, %v1112
        %1153 = vst.msk [vmem:[#allocation3 + $0x64] sm:$0xf] %vm536, %v1114
        %1154 = vst.msk [vmem:[#allocation3 + $0x70] sm:$0xf] %vm536, %v1116
        %1155 = vst.msk [vmem:[#allocation3 + $0x7c] sm:$0xf] %vm536, %v1118
        %1156 = vst.msk [vmem:[#allocation3 + $0x88] sm:$0xf] %vm536, %v1120
        %1157 = vst.msk [vmem:[#allocation3 + $0x94] sm:$0xf] %vm536, %v1122
        %1158 = vst.msk [vmem:[#allocation3 + $0xa0] sm:$0xf] %vm536, %v1124
        %1159 = vst.msk [vmem:[#allocation3 + $0xac] sm:$0xf] %vm536, %v1126
        %1160 = vst.msk [vmem:[#allocation3 + $0xb8] sm:$0xf] %vm536, %v1128
        %v1161 = vld [vmem:[#allocation2 + $0x10] sm:$0xf]
        %v1162 = vld [vmem:[#allocation2 + $0x14] sm:$0xf]
        %v1163 = vld [vmem:[#allocation2 + $0x18] sm:$0xf]
        %v1164 = vld [vmem:[#allocation2 + $0x1c] sm:$0xf]
        %v1165 = vld [vmem:[#allocation2 + $0x20] sm:$0xf]
        %v1166 = vld [vmem:[#allocation2 + $0x24] sm:$0xf]
        %v1167 = vld [vmem:[#allocation2 + $0x28] sm:$0xf]
        %v1168 = vld [vmem:[#allocation2 + $0x2c] sm:$0xf]
        %v1169 = vld [vmem:[#allocation2 + $0x30] sm:$0xf]
        %v1170 = vld [vmem:[#allocation2 + $0x34] sm:$0xf]
        %v1171 = vld [vmem:[#allocation2 + $0x38] sm:$0xf]
        %v1172 = vld [vmem:[#allocation2 + $0x3c] sm:$0xf]
        %v1173 = vld [vmem:[#allocation2 + $0x40] sm:$0xf]
        %v1174 = vld [vmem:[#allocation2 + $0x44] sm:$0xf]
        %v1175 = vld [vmem:[#allocation2 + $0x48] sm:$0xf]
        %v1176 = vld [vmem:[#allocation2 + $0x4c] sm:$0xf]
        %1193 = vrot.lane.b32.xlu0 %v1161, 64
        %v1194 = vpop.permute.xlu0 %1193
        %1195 = vrot.lane.b32.xlu0 %v1162, 64
        %v1196 = vpop.permute.xlu0 %1195
        %1197 = vrot.lane.b32.xlu0 %v1163, 64
        %v1198 = vpop.permute.xlu0 %1197
        %1199 = vrot.lane.b32.xlu0 %v1164, 64
        %v1200 = vpop.permute.xlu0 %1199
        %1201 = vrot.lane.b32.xlu0 %v1165, 64
        %v1202 = vpop.permute.xlu0 %1201
        %1203 = vrot.lane.b32.xlu0 %v1166, 64
        %v1204 = vpop.permute.xlu0 %1203
        %1205 = vrot.lane.b32.xlu0 %v1167, 64
        %v1206 = vpop.permute.xlu0 %1205
        %1207 = vrot.lane.b32.xlu0 %v1168, 64
        %v1208 = vpop.permute.xlu0 %1207
        %1209 = vrot.lane.b32.xlu0 %v1169, 64
        %v1210 = vpop.permute.xlu0 %1209
        %1211 = vrot.lane.b32.xlu0 %v1170, 64
        %v1212 = vpop.permute.xlu0 %1211
        %1213 = vrot.lane.b32.xlu0 %v1171, 64
        %v1214 = vpop.permute.xlu0 %1213
        %1215 = vrot.lane.b32.xlu0 %v1172, 64
        %v1216 = vpop.permute.xlu0 %1215
        %1217 = vrot.lane.b32.xlu0 %v1173, 64
        %v1218 = vpop.permute.xlu0 %1217
        %1219 = vrot.lane.b32.xlu0 %v1174, 64
        %v1220 = vpop.permute.xlu0 %1219
        %1221 = vrot.lane.b32.xlu0 %v1175, 64
        %v1222 = vpop.permute.xlu0 %1221
        %1223 = vrot.lane.b32.xlu0 %v1176, 64
        %v1224 = vpop.permute.xlu0 %1223
        %1241 = vst.msk [vmem:[#allocation3 + $0x4] sm:$0xf] %vm687, %v1194
        %1242 = vst.msk [vmem:[#allocation3 + $0x10] sm:$0xf] %vm687, %v1196
        %1243 = vst.msk [vmem:[#allocation3 + $0x1c] sm:$0xf] %vm687, %v1198
        %1244 = vst.msk [vmem:[#allocation3 + $0x28] sm:$0xf] %vm687, %v1200
        %1245 = vst.msk [vmem:[#allocation3 + $0x34] sm:$0xf] %vm687, %v1202
        %1246 = vst.msk [vmem:[#allocation3 + $0x40] sm:$0xf] %vm687, %v1204
        %1247 = vst.msk [vmem:[#allocation3 + $0x4c] sm:$0xf] %vm687, %v1206
        %1248 = vst.msk [vmem:[#allocation3 + $0x58] sm:$0xf] %vm687, %v1208
        %1249 = vst.msk [vmem:[#allocation3 + $0x64] sm:$0xf] %vm687, %v1210
        %1250 = vst.msk [vmem:[#allocation3 + $0x70] sm:$0xf] %vm687, %v1212
        %1251 = vst.msk [vmem:[#allocation3 + $0x7c] sm:$0xf] %vm687, %v1214
        %1252 = vst.msk [vmem:[#allocation3 + $0x88] sm:$0xf] %vm687, %v1216
        %1253 = vst.msk [vmem:[#allocation3 + $0x94] sm:$0xf] %vm687, %v1218
        %1254 = vst.msk [vmem:[#allocation3 + $0xa0] sm:$0xf] %vm687, %v1220
        %1255 = vst.msk [vmem:[#allocation3 + $0xac] sm:$0xf] %vm687, %v1222
        %1256 = vst.msk [vmem:[#allocation3 + $0xb8] sm:$0xf] %vm687, %v1224
        %v1257 = vld [vmem:[#allocation2 + $0x10] sm:$0xf]
        %v1258 = vld [vmem:[#allocation2 + $0x14] sm:$0xf]
        %v1259 = vld [vmem:[#allocation2 + $0x18] sm:$0xf]
        %v1260 = vld [vmem:[#allocation2 + $0x1c] sm:$0xf]
        %v1261 = vld [vmem:[#allocation2 + $0x20] sm:$0xf]
        %v1262 = vld [vmem:[#allocation2 + $0x24] sm:$0xf]
        %v1263 = vld [vmem:[#allocation2 + $0x28] sm:$0xf]
        %v1264 = vld [vmem:[#allocation2 + $0x2c] sm:$0xf]
        %v1265 = vld [vmem:[#allocation2 + $0x30] sm:$0xf]
        %v1266 = vld [vmem:[#allocation2 + $0x34] sm:$0xf]
        %v1267 = vld [vmem:[#allocation2 + $0x38] sm:$0xf]
        %v1268 = vld [vmem:[#allocation2 + $0x3c] sm:$0xf]
        %v1269 = vld [vmem:[#allocation2 + $0x40] sm:$0xf]
        %v1270 = vld [vmem:[#allocation2 + $0x44] sm:$0xf]
        %v1271 = vld [vmem:[#allocation2 + $0x48] sm:$0xf]
        %v1272 = vld [vmem:[#allocation2 + $0x4c] sm:$0xf]
        %v1273 = vld [vmem:[#allocation2 + $0x50] sm:$0x1]
        %v1275 = vshrl.u32 %v1257, 16
        %v1277 = vrot.slane %v1275, 4
        %v1278 = vshll.u32 %v1257, 16
        %v1280 = vrot.slane %v1278, 5
        %v1281 = vor.u32 %v1277, %v1280
        %v1282 = vrot.slane %v1281, 4
        %v1284 = vshll.u32 %v1258, 16
        %v1286 = vrot.slane %v1284, 5
        %v1287 = vsel %vm323, %v1282, %v1286
        %v1288 = vshrl.u32 %v1258, 16
        %v1290 = vrot.slane %v1288, 4
        %v1291 = vor.u32 %v1290, %v1286
        %v1292 = vrot.slane %v1291, 4
        %v1294 = vshll.u32 %v1259, 16
        %v1296 = vrot.slane %v1294, 5
        %v1297 = vsel %vm323, %v1292, %v1296
        %v1298 = vshrl.u32 %v1259, 16
        %v1300 = vrot.slane %v1298, 4
        %v1301 = vor.u32 %v1300, %v1296
        %v1302 = vrot.slane %v1301, 4
        %v1304 = vshll.u32 %v1260, 16
        %v1306 = vrot.slane %v1304, 5
        %v1307 = vsel %vm323, %v1302, %v1306
        %v1308 = vshrl.u32 %v1260, 16
        %v1310 = vrot.slane %v1308, 4
        %v1311 = vor.u32 %v1310, %v1306
        %v1312 = vrot.slane %v1311, 4
        %v1314 = vshll.u32 %v1261, 16
        %v1316 = vrot.slane %v1314, 5
        %v1317 = vsel %vm323, %v1312, %v1316
        %v1318 = vshrl.u32 %v1261, 16
        %v1320 = vrot.slane %v1318, 4
        %v1321 = vor.u32 %v1320, %v1316
        %v1322 = vrot.slane %v1321, 4
        %v1324 = vshll.u32 %v1262, 16
        %v1326 = vrot.slane %v1324, 5
        %v1327 = vsel %vm323, %v1322, %v1326
        %v1328 = vshrl.u32 %v1262, 16
        %v1330 = vrot.slane %v1328, 4
        %v1331 = vor.u32 %v1330, %v1326
        %v1332 = vrot.slane %v1331, 4
        %v1334 = vshll.u32 %v1263, 16
        %v1336 = vrot.slane %v1334, 5
        %v1337 = vsel %vm323, %v1332, %v1336
        %v1338 = vshrl.u32 %v1263, 16
        %v1340 = vrot.slane %v1338, 4
        %v1341 = vor.u32 %v1340, %v1336
        %v1342 = vrot.slane %v1341, 4
        %v1344 = vshll.u32 %v1264, 16
        %v1346 = vrot.slane %v1344, 5
        %v1347 = vsel %vm323, %v1342, %v1346
        %v1348 = vshrl.u32 %v1264, 16
        %v1350 = vrot.slane %v1348, 4
        %v1351 = vor.u32 %v1350, %v1346
        %v1352 = vrot.slane %v1351, 4
        %v1354 = vshll.u32 %v1265, 16
        %v1356 = vrot.slane %v1354, 5
        %v1357 = vsel %vm323, %v1352, %v1356
        %v1358 = vshrl.u32 %v1265, 16
        %v1360 = vrot.slane %v1358, 4
        %v1361 = vor.u32 %v1360, %v1356
        %v1362 = vrot.slane %v1361, 4
        %v1364 = vshll.u32 %v1266, 16
        %v1366 = vrot.slane %v1364, 5
        %v1367 = vsel %vm323, %v1362, %v1366
        %v1368 = vshrl.u32 %v1266, 16
        %v1370 = vrot.slane %v1368, 4
        %v1371 = vor.u32 %v1370, %v1366
        %v1372 = vrot.slane %v1371, 4
        %v1374 = vshll.u32 %v1267, 16
        %v1376 = vrot.slane %v1374, 5
        %v1377 = vsel %vm323, %v1372, %v1376
        %v1378 = vshrl.u32 %v1267, 16
        %v1380 = vrot.slane %v1378, 4
        %v1381 = vor.u32 %v1380, %v1376
        %v1382 = vrot.slane %v1381, 4
        %v1384 = vshll.u32 %v1268, 16
        %v1386 = vrot.slane %v1384, 5
        %v1387 = vsel %vm323, %v1382, %v1386
        %v1388 = vshrl.u32 %v1268, 16
        %v1390 = vrot.slane %v1388, 4
        %v1391 = vor.u32 %v1390, %v1386
        %v1392 = vrot.slane %v1391, 4
        %v1394 = vshll.u32 %v1269, 16
        %v1396 = vrot.slane %v1394, 5
        %v1397 = vsel %vm323, %v1392, %v1396
        %v1398 = vshrl.u32 %v1269, 16
        %v1400 = vrot.slane %v1398, 4
        %v1401 = vor.u32 %v1400, %v1396
        %v1402 = vrot.slane %v1401, 4
        %v1404 = vshll.u32 %v1270, 16
        %v1406 = vrot.slane %v1404, 5
        %v1407 = vsel %vm323, %v1402, %v1406
        %v1408 = vshrl.u32 %v1270, 16
        %v1410 = vrot.slane %v1408, 4
        %v1411 = vor.u32 %v1410, %v1406
        %v1412 = vrot.slane %v1411, 4
        %v1414 = vshll.u32 %v1271, 16
        %v1416 = vrot.slane %v1414, 5
        %v1417 = vsel %vm323, %v1412, %v1416
        %v1418 = vshrl.u32 %v1271, 16
        %v1420 = vrot.slane %v1418, 4
        %v1421 = vor.u32 %v1420, %v1416
        %v1422 = vrot.slane %v1421, 4
        %v1424 = vshll.u32 %v1272, 16
        %v1426 = vrot.slane %v1424, 5
        %v1427 = vsel %vm323, %v1422, %v1426
        %v1428 = vshrl.u32 %v1272, 16
        %v1430 = vrot.slane %v1428, 4
        %v1431 = vor.u32 %v1430, %v1426
        %v1432 = vrot.slane %v1431, 4
        %v1434 = vshll.u32 %v1273, 16
        %v1436 = vrot.slane %v1434, 5
        %v1437 = vsel %vm323, %v1432, %v1436
        %1438 = vrot.lane.b32.xlu0 %v1287, 96
        %v1439 = vpop.permute.xlu0 %1438
        %1440 = vrot.lane.b32.xlu0 %v1297, 96
        %v1441 = vpop.permute.xlu0 %1440
        %1442 = vrot.lane.b32.xlu0 %v1307, 96
        %v1443 = vpop.permute.xlu0 %1442
        %1444 = vrot.lane.b32.xlu0 %v1317, 96
        %v1445 = vpop.permute.xlu0 %1444
        %1446 = vrot.lane.b32.xlu0 %v1327, 96
        %v1447 = vpop.permute.xlu0 %1446
        %1448 = vrot.lane.b32.xlu0 %v1337, 96
        %v1449 = vpop.permute.xlu0 %1448
        %1450 = vrot.lane.b32.xlu0 %v1347, 96
        %v1451 = vpop.permute.xlu0 %1450
        %1452 = vrot.lane.b32.xlu0 %v1357, 96
        %v1453 = vpop.permute.xlu0 %1452
        %1454 = vrot.lane.b32.xlu0 %v1367, 96
        %v1455 = vpop.permute.xlu0 %1454
        %1456 = vrot.lane.b32.xlu0 %v1377, 96
        %v1457 = vpop.permute.xlu0 %1456
        %1458 = vrot.lane.b32.xlu0 %v1387, 96
        %v1459 = vpop.permute.xlu0 %1458
        %1460 = vrot.lane.b32.xlu0 %v1397, 96
        %v1461 = vpop.permute.xlu0 %1460
        %1462 = vrot.lane.b32.xlu0 %v1407, 96
        %v1463 = vpop.permute.xlu0 %1462
        %1464 = vrot.lane.b32.xlu0 %v1417, 96
        %v1465 = vpop.permute.xlu0 %1464
        %1466 = vrot.lane.b32.xlu0 %v1427, 96
        %v1467 = vpop.permute.xlu0 %1466
        %1468 = vrot.lane.b32.xlu0 %v1437, 96
        %v1469 = vpop.permute.xlu0 %1468
        %1486 = vst.msk [vmem:[#allocation3 + $0x4] sm:$0xf] %vm784, %v1439
        %1487 = vst.msk [vmem:[#allocation3 + $0x10] sm:$0xf] %vm784, %v1441
        %1488 = vst.msk [vmem:[#allocation3 + $0x1c] sm:$0xf] %vm784, %v1443
        %1489 = vst.msk [vmem:[#allocation3 + $0x28] sm:$0xf] %vm784, %v1445
        %1490 = vst.msk [vmem:[#allocation3 + $0x34] sm:$0xf] %vm784, %v1447
        %1491 = vst.msk [vmem:[#allocation3 + $0x40] sm:$0xf] %vm784, %v1449
        %1492 = vst.msk [vmem:[#allocation3 + $0x4c] sm:$0xf] %vm784, %v1451
        %1493 = vst.msk [vmem:[#allocation3 + $0x58] sm:$0xf] %vm784, %v1453
        %1494 = vst.msk [vmem:[#allocation3 + $0x64] sm:$0xf] %vm784, %v1455
        %1495 = vst.msk [vmem:[#allocation3 + $0x70] sm:$0xf] %vm784, %v1457
        %1496 = vst.msk [vmem:[#allocation3 + $0x7c] sm:$0xf] %vm784, %v1459
        %1497 = vst.msk [vmem:[#allocation3 + $0x88] sm:$0xf] %vm784, %v1461
        %1498 = vst.msk [vmem:[#allocation3 + $0x94] sm:$0xf] %vm784, %v1463
        %1499 = vst.msk [vmem:[#allocation3 + $0xa0] sm:$0xf] %vm784, %v1465
        %1500 = vst.msk [vmem:[#allocation3 + $0xac] sm:$0xf] %vm784, %v1467
        %1501 = vst.msk [vmem:[#allocation3 + $0xb8] sm:$0xf] %vm784, %v1469
        %v1502 = vld [vmem:[#allocation2 + $0x10] sm:$0xe]
        %v1503 = vld [vmem:[#allocation2 + $0x14] sm:$0xf]
        %v1504 = vld [vmem:[#allocation2 + $0x18] sm:$0xf]
        %v1505 = vld [vmem:[#allocation2 + $0x1c] sm:$0xf]
        %v1506 = vld [vmem:[#allocation2 + $0x20] sm:$0xf]
        %v1507 = vld [vmem:[#allocation2 + $0x24] sm:$0xf]
        %v1508 = vld [vmem:[#allocation2 + $0x28] sm:$0xf]
        %v1509 = vld [vmem:[#allocation2 + $0x2c] sm:$0xf]
        %v1510 = vld [vmem:[#allocation2 + $0x30] sm:$0xf]
        %v1511 = vld [vmem:[#allocation2 + $0x34] sm:$0xf]
        %v1512 = vld [vmem:[#allocation2 + $0x38] sm:$0xf]
        %v1513 = vld [vmem:[#allocation2 + $0x3c] sm:$0xf]
        %v1514 = vld [vmem:[#allocation2 + $0x40] sm:$0xf]
        %v1515 = vld [vmem:[#allocation2 + $0x44] sm:$0xf]
        %v1516 = vld [vmem:[#allocation2 + $0x48] sm:$0xf]
        %v1517 = vld [vmem:[#allocation2 + $0x4c] sm:$0xf]
        %v1518 = vld [vmem:[#allocation2 + $0x50] sm:$0x1]
        %v1536 = vrot.slane %v1502, 5
        %v1537 = vrot.slane %v1536, 4
        %v1538 = vrot.slane %v1503, 5
        %v1539 = vsel %vm589, %v1537, %v1538
        %v1540 = vrot.slane %v1538, 4
        %v1541 = vrot.slane %v1504, 5
        %v1542 = vsel %vm589, %v1540, %v1541
        %v1543 = vrot.slane %v1541, 4
        %v1544 = vrot.slane %v1505, 5
        %v1545 = vsel %vm589, %v1543, %v1544
        %v1546 = vrot.slane %v1544, 4
        %v1547 = vrot.slane %v1506, 5
        %v1548 = vsel %vm589, %v1546, %v1547
        %v1549 = vrot.slane %v1547, 4
        %v1550 = vrot.slane %v1507, 5
        %v1551 = vsel %vm589, %v1549, %v1550
        %v1552 = vrot.slane %v1550, 4
        %v1553 = vrot.slane %v1508, 5
        %v1554 = vsel %vm589, %v1552, %v1553
        %v1555 = vrot.slane %v1553, 4
        %v1556 = vrot.slane %v1509, 5
        %v1557 = vsel %vm589, %v1555, %v1556
        %v1558 = vrot.slane %v1556, 4
        %v1559 = vrot.slane %v1510, 5
        %v1560 = vsel %vm589, %v1558, %v1559
        %v1561 = vrot.slane %v1559, 4
        %v1562 = vrot.slane %v1511, 5
        %v1563 = vsel %vm589, %v1561, %v1562
        %v1564 = vrot.slane %v1562, 4
        %v1565 = vrot.slane %v1512, 5
        %v1566 = vsel %vm589, %v1564, %v1565
        %v1567 = vrot.slane %v1565, 4
        %v1568 = vrot.slane %v1513, 5
        %v1569 = vsel %vm589, %v1567, %v1568
        %v1570 = vrot.slane %v1568, 4
        %v1571 = vrot.slane %v1514, 5
        %v1572 = vsel %vm589, %v1570, %v1571
        %v1573 = vrot.slane %v1571, 4
        %v1574 = vrot.slane %v1515, 5
        %v1575 = vsel %vm589, %v1573, %v1574
        %v1576 = vrot.slane %v1574, 4
        %v1577 = vrot.slane %v1516, 5
        %v1578 = vsel %vm589, %v1576, %v1577
        %v1579 = vrot.slane %v1577, 4
        %v1580 = vrot.slane %v1517, 5
        %v1581 = vsel %vm589, %v1579, %v1580
        %v1582 = vrot.slane %v1580, 4
        %v1583 = vrot.slane %v1518, 5
        %v1584 = vsel %vm589, %v1582, %v1583
        %1601 = vst.msk [vmem:[#allocation3 + $0x8] sm:$0xf] %vm226, %v1539
        %1602 = vst.msk [vmem:[#allocation3 + $0x14] sm:$0xf] %vm226, %v1542
        %1603 = vst.msk [vmem:[#allocation3 + $0x20] sm:$0xf] %vm226, %v1545
        %1604 = vst.msk [vmem:[#allocation3 + $0x2c] sm:$0xf] %vm226, %v1548
        %1605 = vst.msk [vmem:[#allocation3 + $0x38] sm:$0xf] %vm226, %v1551
        %1606 = vst.msk [vmem:[#allocation3 + $0x44] sm:$0xf] %vm226, %v1554
        %1607 = vst.msk [vmem:[#allocation3 + $0x50] sm:$0xf] %vm226, %v1557
        %1608 = vst.msk [vmem:[#allocation3 + $0x5c] sm:$0xf] %vm226, %v1560
        %1609 = vst.msk [vmem:[#allocation3 + $0x68] sm:$0xf] %vm226, %v1563
        %1610 = vst.msk [vmem:[#allocation3 + $0x74] sm:$0xf] %vm226, %v1566
        %1611 = vst.msk [vmem:[#allocation3 + $0x80] sm:$0xf] %vm226, %v1569
        %1612 = vst.msk [vmem:[#allocation3 + $0x8c] sm:$0xf] %vm226, %v1572
        %1613 = vst.msk [vmem:[#allocation3 + $0x98] sm:$0xf] %vm226, %v1575
        %1614 = vst.msk [vmem:[#allocation3 + $0xa4] sm:$0xf] %vm226, %v1578
        %1615 = vst.msk [vmem:[#allocation3 + $0xb0] sm:$0xf] %vm226, %v1581
        %1616 = vst.msk [vmem:[#allocation3 + $0xbc] sm:$0xf] %vm226, %v1584
        %v1617 = vld [vmem:[#allocation3] sm:$0xff]
        %v1618 = vld [vmem:[#allocation3 + $0x8] sm:$0xf]
        %v1619 = vld [vmem:[#allocation3 + $0xc] sm:$0xff]
        %v1620 = vld [vmem:[#allocation3 + $0x14] sm:$0xf]
        %v1621 = vld [vmem:[#allocation3 + $0x18] sm:$0xff]
        %v1622 = vld [vmem:[#allocation3 + $0x20] sm:$0xf]
        %v1623 = vld [vmem:[#allocation3 + $0x24] sm:$0xff]
        %v1624 = vld [vmem:[#allocation3 + $0x2c] sm:$0xf]
        %v1625 = vld [vmem:[#allocation3 + $0x30] sm:$0xff]
        %v1626 = vld [vmem:[#allocation3 + $0x38] sm:$0xf]
        %v1627 = vld [vmem:[#allocation3 + $0x3c] sm:$0xff]
        %v1628 = vld [vmem:[#allocation3 + $0x44] sm:$0xf]
        %v1629 = vld [vmem:[#allocation3 + $0x48] sm:$0xff]
        %v1630 = vld [vmem:[#allocation3 + $0x50] sm:$0xf]
        %v1631 = vld [vmem:[#allocation3 + $0x54] sm:$0xff]
        %v1632 = vld [vmem:[#allocation3 + $0x5c] sm:$0xf]
        %v1633 = vld [vmem:[#allocation3 + $0x60] sm:$0xff]
        %v1634 = vld [vmem:[#allocation3 + $0x68] sm:$0xf]
        %v1635 = vld [vmem:[#allocation3 + $0x6c] sm:$0xff]
        %v1636 = vld [vmem:[#allocation3 + $0x74] sm:$0xf]
        %v1637 = vld [vmem:[#allocation3 + $0x78] sm:$0xff]
        %v1638 = vld [vmem:[#allocation3 + $0x80] sm:$0xf]
        %v1639 = vld [vmem:[#allocation3 + $0x84] sm:$0xff]
        %v1640 = vld [vmem:[#allocation3 + $0x8c] sm:$0xf]
        %v1641 = vld [vmem:[#allocation3 + $0x90] sm:$0xff]
        %v1642 = vld [vmem:[#allocation3 + $0x98] sm:$0xf]
        %v1643 = vld [vmem:[#allocation3 + $0x9c] sm:$0xff]
        %v1644 = vld [vmem:[#allocation3 + $0xa4] sm:$0xf]
        %v1645 = vld [vmem:[#allocation3 + $0xa8] sm:$0xff]
        %v1646 = vld [vmem:[#allocation3 + $0xb0] sm:$0xf]
        %v1647 = vld [vmem:[#allocation3 + $0xb4] sm:$0xff]
        %v1648 = vld [vmem:[#allocation3 + $0xbc] sm:$0xf]
        %v1649 = vld [vmem:[%s215] sm:$0xf]
        %v1650 = vld [vmem:[%s215 + $0x4] sm:$0xf]
        %v1651 = vld [vmem:[%s215 + $0x8] sm:$0xf]
        %v1652 = vld [vmem:[%s215 + $0xc] sm:$0xf]
        %v1653 = vld [vmem:[%s215 + $0x10] sm:$0xf]
        %v1654 = vld [vmem:[%s215 + $0x14] sm:$0xf]
        %v1655 = vld [vmem:[%s215 + $0x18] sm:$0xf]
        %v1656 = vld [vmem:[%s215 + $0x1c] sm:$0xf]
        %v1657 = vld [vmem:[%s215 + $0x20] sm:$0xf]
        %v1658 = vld [vmem:[%s215 + $0x24] sm:$0xf]
        %v1659 = vld [vmem:[%s215 + $0x28] sm:$0xf]
        %v1660 = vld [vmem:[%s215 + $0x2c] sm:$0xf]
        %v1661 = vld [vmem:[%s215 + $0x30] sm:$0xf]
        %v1662 = vld [vmem:[%s215 + $0x34] sm:$0xf]
        %v1663 = vld [vmem:[%s215 + $0x38] sm:$0xf]
        %v1664 = vld [vmem:[%s215 + $0x3c] sm:$0xf]
        %v1665 = vld [vmem:[%s215 + $0x40] sm:$0xf]
        %v1666 = vld [vmem:[%s215 + $0x44] sm:$0xf]
        %v1667 = vld [vmem:[%s215 + $0x48] sm:$0xf]
        %v1668 = vld [vmem:[%s215 + $0x4c] sm:$0xf]
        %v1669 = vld [vmem:[%s215 + $0x50] sm:$0xf]
        %v1670 = vld [vmem:[%s215 + $0x54] sm:$0xf]
        %v1671 = vld [vmem:[%s215 + $0x58] sm:$0xf]
        %v1672 = vld [vmem:[%s215 + $0x5c] sm:$0xf]
        %v1673 = vld [vmem:[%s215 + $0x60] sm:$0xf]
        %v1674 = vld [vmem:[%s215 + $0x64] sm:$0xf]
        %v1675 = vld [vmem:[%s215 + $0x68] sm:$0xf]
        %v1676 = vld [vmem:[%s215 + $0x6c] sm:$0xf]
        %v1677 = vld [vmem:[%s215 + $0x70] sm:$0xf]
        %v1678 = vld [vmem:[%s215 + $0x74] sm:$0xf]
        %v1679 = vld [vmem:[%s215 + $0x78] sm:$0xf]
        %v1680 = vld [vmem:[%s215 + $0x7c] sm:$0xf]
        %v1681 = vld [vmem:[%s215 + $0x80] sm:$0xf]
        %v1682 = vld [vmem:[%s215 + $0x84] sm:$0xf]
        %v1683 = vld [vmem:[%s215 + $0x88] sm:$0xf]
        %v1684 = vld [vmem:[%s215 + $0x8c] sm:$0xf]
        %v1685 = vld [vmem:[%s218] sm:$0x1]
        %v1687 = vperm.slane %v1685, 0
        %v1721 = vunpack.c.l.b16 %v1617
        %v1722 = vunpack.c.h.b16 %v1617
        %v1723 = vunpack.c.l.b16 %v1618
        %v1724 = vunpack.c.l.b16 %v1619
        %v1725 = vunpack.c.h.b16 %v1619
        %v1726 = vunpack.c.l.b16 %v1620
        %v1727 = vunpack.c.l.b16 %v1621
        %v1728 = vunpack.c.h.b16 %v1621
        %v1729 = vunpack.c.l.b16 %v1622
        %v1730 = vunpack.c.l.b16 %v1623
        %v1731 = vunpack.c.h.b16 %v1623
        %v1732 = vunpack.c.l.b16 %v1624
        %v1733 = vunpack.c.l.b16 %v1625
        %v1734 = vunpack.c.h.b16 %v1625
        %v1735 = vunpack.c.l.b16 %v1626
        %v1736 = vunpack.c.l.b16 %v1627
        %v1737 = vunpack.c.h.b16 %v1627
        %v1738 = vunpack.c.l.b16 %v1628
        %v1739 = vunpack.c.l.b16 %v1629
        %v1740 = vunpack.c.h.b16 %v1629
        %v1741 = vunpack.c.l.b16 %v1630
        %v1742 = vunpack.c.l.b16 %v1631
        %v1743 = vunpack.c.h.b16 %v1631
        %v1744 = vunpack.c.l.b16 %v1632
        %v1745 = vunpack.c.l.b16 %v1633
        %v1746 = vunpack.c.h.b16 %v1633
        %v1747 = vunpack.c.l.b16 %v1634
        %v1748 = vunpack.c.l.b16 %v1635
        %v1749 = vunpack.c.h.b16 %v1635
        %v1750 = vunpack.c.l.b16 %v1636
        %v1751 = vunpack.c.l.b16 %v1637
        %v1752 = vunpack.c.h.b16 %v1637
        %v1753 = vunpack.c.l.b16 %v1638
        %v1754 = vunpack.c.l.b16 %v1639
        %v1755 = vunpack.c.h.b16 %v1639
        %v1756 = vunpack.c.l.b16 %v1640
        %v1757 = vunpack.c.l.b16 %v1641
        %v1758 = vunpack.c.h.b16 %v1641
        %v1759 = vunpack.c.l.b16 %v1642
        %v1760 = vunpack.c.l.b16 %v1643
        %v1761 = vunpack.c.h.b16 %v1643
        %v1762 = vunpack.c.l.b16 %v1644
        %v1763 = vunpack.c.l.b16 %v1645
        %v1764 = vunpack.c.h.b16 %v1645
        %v1765 = vunpack.c.l.b16 %v1646
        %v1766 = vunpack.c.l.b16 %v1647
        %v1767 = vunpack.c.h.b16 %v1647
        %v1768 = vunpack.c.l.b16 %v1648
        %v1769 = vpack.c.b16 %v1724, %v1721
        %v1770 = vpack.c.b16 %v1725, %v1722
        %v1771 = vpack.c.b16 %v1726, %v1723
        %v1772 = vpack.c.b16 %v1730, %v1727
        %v1773 = vpack.c.b16 %v1731, %v1728
        %v1774 = vpack.c.b16 %v1732, %v1729
        %v1775 = vpack.c.b16 %v1736, %v1733
        %v1776 = vpack.c.b16 %v1737, %v1734
        %v1777 = vpack.c.b16 %v1738, %v1735
        %v1778 = vpack.c.b16 %v1742, %v1739
        %v1779 = vpack.c.b16 %v1743, %v1740
        %v1780 = vpack.c.b16 %v1744, %v1741
        %v1781 = vpack.c.b16 %v1748, %v1745
        %v1782 = vpack.c.b16 %v1749, %v1746
        %v1783 = vpack.c.b16 %v1750, %v1747
        %v1784 = vpack.c.b16 %v1754, %v1751
        %v1785 = vpack.c.b16 %v1755, %v1752
        %v1786 = vpack.c.b16 %v1756, %v1753
        %v1787 = vpack.c.b16 %v1760, %v1757
        %v1788 = vpack.c.b16 %v1761, %v1758
        %v1789 = vpack.c.b16 %v1762, %v1759
        %v1790 = vpack.c.b16 %v1766, %v1763
        %v1791 = vpack.c.b16 %v1767, %v1764
        %v1792 = vpack.c.b16 %v1768, %v1765
        %v1845 = vunpack.c.l.b16 %v1649
        %v1846 = vunpack.c.l.b16 %v1650
        %v1847 = vunpack.c.l.b16 %v1651
        %v1848 = vunpack.c.l.b16 %v1652
        %v1849 = vunpack.c.l.b16 %v1653
        %v1850 = vunpack.c.l.b16 %v1654
        %v1851 = vunpack.c.l.b16 %v1655
        %v1852 = vunpack.c.l.b16 %v1656
        %v1853 = vunpack.c.l.b16 %v1657
        %v1854 = vunpack.c.l.b16 %v1658
        %v1855 = vunpack.c.l.b16 %v1659
        %v1856 = vunpack.c.l.b16 %v1660
        %v1857 = vunpack.c.l.b16 %v1661
        %v1858 = vunpack.c.l.b16 %v1662
        %v1859 = vunpack.c.l.b16 %v1663
        %v1860 = vunpack.c.l.b16 %v1664
        %v1861 = vunpack.c.l.b16 %v1665
        %v1862 = vunpack.c.l.b16 %v1666
        %v1863 = vunpack.c.l.b16 %v1667
        %v1864 = vunpack.c.l.b16 %v1668
        %v1865 = vunpack.c.l.b16 %v1669
        %v1866 = vunpack.c.l.b16 %v1670
        %v1867 = vunpack.c.l.b16 %v1671
        %v1868 = vunpack.c.l.b16 %v1672
        %v1869 = vunpack.c.l.b16 %v1673
        %v1870 = vunpack.c.l.b16 %v1674
        %v1871 = vunpack.c.l.b16 %v1675
        %v1872 = vunpack.c.l.b16 %v1676
        %v1873 = vunpack.c.l.b16 %v1677
        %v1874 = vunpack.c.l.b16 %v1678
        %v1875 = vunpack.c.l.b16 %v1679
        %v1876 = vunpack.c.l.b16 %v1680
        %v1877 = vunpack.c.l.b16 %v1681
        %v1878 = vunpack.c.l.b16 %v1682
        %v1879 = vunpack.c.l.b16 %v1683
        %v1880 = vunpack.c.l.b16 %v1684
        %v1881 = vpack.c.b16 %v1846, %v1845
        %v1882 = vpack.c.b16 %v1848, %v1847
        %v1883 = vpack.c.b16 %v1850, %v1849
        %v1884 = vpack.c.b16 %v1852, %v1851
        %v1885 = vpack.c.b16 %v1854, %v1853
        %v1886 = vpack.c.b16 %v1856, %v1855
        %v1887 = vpack.c.b16 %v1858, %v1857
        %v1888 = vpack.c.b16 %v1860, %v1859
        %v1889 = vpack.c.b16 %v1862, %v1861
        %v1890 = vpack.c.b16 %v1864, %v1863
        %v1891 = vpack.c.b16 %v1866, %v1865
        %v1892 = vpack.c.b16 %v1868, %v1867
        %v1893 = vpack.c.b16 %v1870, %v1869
        %v1894 = vpack.c.b16 %v1872, %v1871
        %v1895 = vpack.c.b16 %v1874, %v1873
        %v1896 = vpack.c.b16 %v1876, %v1875
        %v1897 = vpack.c.b16 %v1878, %v1877
        %v1898 = vpack.c.b16 %v1880, %v1879
        %vm1917 = vcmask 261120
        %v1919 = vsel %vm1917, %v1771, 0
        %v1922 = vsel %vm1917, %v1774, 0
        %v1925 = vsel %vm1917, %v1777, 0
        %v1928 = vsel %vm1917, %v1780, 0
        %v1931 = vsel %vm1917, %v1783, 0
        %v1934 = vsel %vm1917, %v1786, 0
        %v1937 = vsel %vm1917, %v1789, 0
        %v1940 = vsel %vm1917, %v1792, 0
        %1942 = vmatpush.bf16.msra.mxu0 %v1888
        %1943 = vmatpush.bf16.msra.mxu0 %v1887
        %1944 = vmatpush.bf16.msra.mxu0 %v1886
        %1945 = vmatpush.bf16.msra.mxu0 %v1885
        %1946 = vmatpush.bf16.msra.mxu0 %v1884
        %1947 = vmatpush.bf16.msra.mxu0 %v1883
        %1948 = vmatpush.bf16.msra.mxu0 %v1882
        %1949 = vmatpush.bf16.msra.mxu0 %v1881
        %1950 = vmatmul.bf16.gmra.mxu0 %v1769
        %v1951 = vpop.f32.mrf.mxu0
        %v1952 = vadd.f32 %v1687, %v1951
        %v1953 = vpop.f32.mrf.mxu0
        %1954 = vmatmul.bf16.gmra.mxu0 %v1772
        %v1955 = vpop.f32.mrf.mxu0
        %v1956 = vadd.f32 %v1687, %v1955
        %v1957 = vpop.f32.mrf.mxu0
        %1958 = vmatmul.bf16.gmra.mxu0 %v1775
        %v1959 = vpop.f32.mrf.mxu0
        %v1960 = vadd.f32 %v1687, %v1959
        %v1961 = vpop.f32.mrf.mxu0
        %1962 = vmatmul.bf16.gmra.mxu0 %v1778
        %v1963 = vpop.f32.mrf.mxu0
        %v1964 = vadd.f32 %v1687, %v1963
        %v1965 = vpop.f32.mrf.mxu0
        %1966 = vmatmul.bf16.gmra.mxu0 %v1781
        %v1967 = vpop.f32.mrf.mxu0
        %v1968 = vadd.f32 %v1687, %v1967
        %v1969 = vpop.f32.mrf.mxu0
        %1970 = vmatmul.bf16.gmra.mxu0 %v1784
        %v1971 = vpop.f32.mrf.mxu0
        %v1972 = vadd.f32 %v1687, %v1971
        %v1973 = vpop.f32.mrf.mxu0
        %1974 = vmatmul.bf16.gmra.mxu0 %v1787
        %v1975 = vpop.f32.mrf.mxu0
        %v1976 = vadd.f32 %v1687, %v1975
        %v1977 = vpop.f32.mrf.mxu0
        %1978 = vmatmul.bf16.gmra.mxu0 %v1790
        %v1979 = vpop.f32.mrf.mxu0
        %v1980 = vadd.f32 %v1687, %v1979
        %v1981 = vpop.f32.mrf.mxu0
        %1982 = vdwg.mxu0
        %1983 = vmatpush.bf16.msra.mxu0 %v1896
        %1984 = vmatpush.bf16.msra.mxu0 %v1895
        %1985 = vmatpush.bf16.msra.mxu0 %v1894
        %1986 = vmatpush.bf16.msra.mxu0 %v1893
        %1987 = vmatpush.bf16.msra.mxu0 %v1892
        %1988 = vmatpush.bf16.msra.mxu0 %v1891
        %1989 = vmatpush.bf16.msra.mxu0 %v1890
        %1990 = vmatpush.bf16.msra.mxu0 %v1889
        %1991 = vmatmul.bf16.gmra.mxu0 %v1770
        %v1992 = vpop.f32.mrf.mxu0
        %v1993 = vadd.f32 %v1952, %v1992
        %v1994 = vpop.f32.mrf.mxu0
        %1995 = vmatmul.bf16.gmra.mxu0 %v1773
        %v1996 = vpop.f32.mrf.mxu0
        %v1997 = vadd.f32 %v1956, %v1996
        %v1998 = vpop.f32.mrf.mxu0
        %1999 = vmatmul.bf16.gmra.mxu0 %v1776
        %v2000 = vpop.f32.mrf.mxu0
        %v2001 = vadd.f32 %v1960, %v2000
        %v2002 = vpop.f32.mrf.mxu0
        %2003 = vmatmul.bf16.gmra.mxu0 %v1779
        %v2004 = vpop.f32.mrf.mxu0
        %v2005 = vadd.f32 %v1964, %v2004
        %v2006 = vpop.f32.mrf.mxu0
        %2007 = vmatmul.bf16.gmra.mxu0 %v1782
        %v2008 = vpop.f32.mrf.mxu0
        %v2009 = vadd.f32 %v1968, %v2008
        %v2010 = vpop.f32.mrf.mxu0
        %2011 = vmatmul.bf16.gmra.mxu0 %v1785
        %v2012 = vpop.f32.mrf.mxu0
        %v2013 = vadd.f32 %v1972, %v2012
        %v2014 = vpop.f32.mrf.mxu0
        %2015 = vmatmul.bf16.gmra.mxu0 %v1788
        %v2016 = vpop.f32.mrf.mxu0
        %v2017 = vadd.f32 %v1976, %v2016
        %v2018 = vpop.f32.mrf.mxu0
        %2019 = vmatmul.bf16.gmra.mxu0 %v1791
        %v2020 = vpop.f32.mrf.mxu0
        %v2021 = vadd.f32 %v1980, %v2020
        %v2022 = vpop.f32.mrf.mxu0
        %2023 = vdwg.mxu0
        %2024 = vmatpush.bf16.msra.mxu0 0
        %2025 = vmatpush.bf16.msra.mxu0 0
        %2026 = vmatpush.bf16.msra.mxu0 0
        %2027 = vmatpush.bf16.msra.mxu0 0
        %2028 = vmatpush.bf16.msra.mxu0 0
        %2029 = vmatpush.bf16.msra.mxu0 0
        %2030 = vmatpush.bf16.msra.mxu0 %v1898
        %2031 = vmatpush.bf16.msra.mxu0 %v1897
        %2032 = vmatmul.bf16.gmra.mxu0 %v1919
        %v2033 = vpop.f32.mrf.mxu0
        %v2034 = vadd.f32 %v1993, %v2033
        %v2035 = vpop.f32.mrf.mxu0
        %2036 = vmatmul.bf16.gmra.mxu0 %v1922
        %v2037 = vpop.f32.mrf.mxu0
        %v2038 = vadd.f32 %v1997, %v2037
        %v2039 = vpop.f32.mrf.mxu0
        %2040 = vmatmul.bf16.gmra.mxu0 %v1925
        %v2041 = vpop.f32.mrf.mxu0
        %v2042 = vadd.f32 %v2001, %v2041
        %v2043 = vpop.f32.mrf.mxu0
        %2044 = vmatmul.bf16.gmra.mxu0 %v1928
        %v2045 = vpop.f32.mrf.mxu0
        %v2046 = vadd.f32 %v2005, %v2045
        %v2047 = vpop.f32.mrf.mxu0
        %2048 = vmatmul.bf16.gmra.mxu0 %v1931
        %v2049 = vpop.f32.mrf.mxu0
        %v2050 = vadd.f32 %v2009, %v2049
        %v2051 = vpop.f32.mrf.mxu0
        %2052 = vmatmul.bf16.gmra.mxu0 %v1934
        %v2053 = vpop.f32.mrf.mxu0
        %v2054 = vadd.f32 %v2013, %v2053
        %v2055 = vpop.f32.mrf.mxu0
        %2056 = vmatmul.bf16.gmra.mxu0 %v1937
        %v2057 = vpop.f32.mrf.mxu0
        %v2058 = vadd.f32 %v2017, %v2057
        %v2059 = vpop.f32.mrf.mxu0
        %2060 = vmatmul.bf16.gmra.mxu0 %v1940
        %v2061 = vpop.f32.mrf.mxu0
        %v2062 = vadd.f32 %v2021, %v2061
        %v2063 = vpop.f32.mrf.mxu0
        %2064 = vdwg.mxu0
        %v2065 = vmax.f32 %v2034, 0.0
        %v2066 = vmax.f32 %v2038, 0.0
        %v2067 = vmax.f32 %v2042, 0.0
        %v2068 = vmax.f32 %v2046, 0.0
        %v2069 = vmax.f32 %v2050, 0.0
        %v2070 = vmax.f32 %v2054, 0.0
        %v2071 = vmax.f32 %v2058, 0.0
        %v2072 = vmax.f32 %v2062, 0.0
        %v2073 = vpack.c.bf16 %v2065, %v2065
        %v2074 = vpack.c.bf16 %v2066, %v2066
        %v2075 = vpack.c.bf16 %v2067, %v2067
        %v2076 = vpack.c.bf16 %v2068, %v2068
        %v2077 = vpack.c.bf16 %v2069, %v2069
        %v2078 = vpack.c.bf16 %v2070, %v2070
        %v2079 = vpack.c.bf16 %v2071, %v2071
        %v2080 = vpack.c.bf16 %v2072, %v2072
        %2081 = vst [vmem:[%s204] sm:$0xf] %v2073
        %2082 = vst [vmem:[%s204 + $0x4] sm:$0xf] %v2074
        %2083 = vst [vmem:[%s204 + $0x8] sm:$0xf] %v2075
        %2084 = vst [vmem:[%s204 + $0xc] sm:$0xf] %v2076
        %2085 = vst [vmem:[%s204 + $0x10] sm:$0xf] %v2077
        %2086 = vst [vmem:[%s204 + $0x14] sm:$0xf] %v2078
        %2087 = vst [vmem:[%s204 + $0x18] sm:$0xf] %v2079
        %2088 = vst [vmem:[%s204 + $0x1c] sm:$0xf] %v2080
        %v2089 = vunpack.c.l.bf16 %v2073
        %v2090 = vunpack.c.l.bf16 %v2074
        %v2091 = vunpack.c.l.bf16 %v2075
        %v2092 = vunpack.c.l.bf16 %v2076
        %v2093 = vunpack.c.l.bf16 %v2077
        %v2094 = vunpack.c.l.bf16 %v2078
        %v2095 = vunpack.c.l.bf16 %v2079
        %v2096 = vunpack.c.l.bf16 %v2080
        %v2097 = vmax.f32 %v2089, %v2090
        %v2098 = vmax.f32 %v2091, %v2092
        %v2099 = vmax.f32 %v2093, %v2094
        %v2100 = vmax.f32 %v2095, %v2096
        %v2101 = vpack.c.bf16 %v2097, %v2097
        %v2102 = vpack.c.bf16 %v2098, %v2098
        %v2103 = vpack.c.bf16 %v2099, %v2099
        %v2104 = vpack.c.bf16 %v2100, %v2100
        %v2109 = vrot.slane %v2101, 3
        %v2110 = vrot.slane %v2102, 3
        %v2111 = vrot.slane %v2103, 3
        %v2112 = vrot.slane %v2104, 3
        %vm2113 = vcmask 1040384
        %v2116 = vsel %vm2113, %v2101, %v2109
        %vm2117 = vcmask 1041409
        %v2118 = vsel %vm2117, %v2101, %v2109
        %v2120 = vrot.slane %v2118, 1
        %vm2121 = vcmask 1042434
        %v2122 = vsel %vm2121, %v2101, %v2109
        %v2124 = vrot.slane %v2122, 2
        %vm2125 = vcmask 1043459
        %v2126 = vsel %vm2125, %v2101, %v2109
        %v2128 = vrot.slane %v2126, 3
        %v2131 = vsel %vm2113, %v2102, %v2110
        %v2132 = vsel %vm2117, %v2102, %v2110
        %v2134 = vrot.slane %v2132, 1
        %v2135 = vsel %vm2121, %v2102, %v2110
        %v2137 = vrot.slane %v2135, 2
        %v2138 = vsel %vm2125, %v2102, %v2110
        %v2140 = vrot.slane %v2138, 3
        %v2143 = vsel %vm2113, %v2103, %v2111
        %v2144 = vsel %vm2117, %v2103, %v2111
        %v2146 = vrot.slane %v2144, 1
        %v2147 = vsel %vm2121, %v2103, %v2111
        %v2149 = vrot.slane %v2147, 2
        %v2150 = vsel %vm2125, %v2103, %v2111
        %v2152 = vrot.slane %v2150, 3
        %v2155 = vsel %vm2113, %v2104, %v2112
        %v2156 = vsel %vm2117, %v2104, %v2112
        %v2158 = vrot.slane %v2156, 1
        %v2159 = vsel %vm2121, %v2104, %v2112
        %v2161 = vrot.slane %v2159, 2
        %v2162 = vsel %vm2125, %v2104, %v2112
        %v2164 = vrot.slane %v2162, 3
        %v2181 = vunpack.c.l.bf16 %v2116
        %v2182 = vunpack.c.l.bf16 %v2120
        %v2183 = vunpack.c.l.bf16 %v2124
        %v2184 = vunpack.c.l.bf16 %v2128
        %v2185 = vunpack.c.l.bf16 %v2131
        %v2186 = vunpack.c.l.bf16 %v2134
        %v2187 = vunpack.c.l.bf16 %v2137
        %v2188 = vunpack.c.l.bf16 %v2140
        %v2189 = vunpack.c.l.bf16 %v2143
        %v2190 = vunpack.c.l.bf16 %v2146
        %v2191 = vunpack.c.l.bf16 %v2149
        %v2192 = vunpack.c.l.bf16 %v2152
        %v2193 = vunpack.c.l.bf16 %v2155
        %v2194 = vunpack.c.l.bf16 %v2158
        %v2195 = vunpack.c.l.bf16 %v2161
        %v2196 = vunpack.c.l.bf16 %v2164
        %vm2197 = vcmask 1041408
        %v2198 = vsel %vm2197, %v2181, -inf
        %v2199 = vrot.slane %v2198, 4
        %v2200 = vmax.f32 %v2198, %v2199
        %v2201 = vrot.slane %v2200, 2
        %v2202 = vmax.f32 %v2200, %v2201
        %v2203 = vrot.slane %v2202, 1
        %v2204 = vmax.f32 %v2202, %v2203
        %v2205 = vsel %vm2197, %v2182, -inf
        %v2206 = vrot.slane %v2205, 4
        %v2207 = vmax.f32 %v2205, %v2206
        %v2208 = vrot.slane %v2207, 2
        %v2209 = vmax.f32 %v2207, %v2208
        %v2210 = vrot.slane %v2209, 1
        %v2211 = vmax.f32 %v2209, %v2210
        %v2212 = vsel %vm2197, %v2183, -inf
        %v2213 = vrot.slane %v2212, 4
        %v2214 = vmax.f32 %v2212, %v2213
        %v2215 = vrot.slane %v2214, 2
        %v2216 = vmax.f32 %v2214, %v2215
        %v2217 = vrot.slane %v2216, 1
        %v2218 = vmax.f32 %v2216, %v2217
        %v2219 = vsel %vm2197, %v2184, -inf
        %v2220 = vrot.slane %v2219, 4
        %v2221 = vmax.f32 %v2219, %v2220
        %v2222 = vrot.slane %v2221, 2
        %v2223 = vmax.f32 %v2221, %v2222
        %v2224 = vrot.slane %v2223, 1
        %v2225 = vmax.f32 %v2223, %v2224
        %v2226 = vsel %vm2197, %v2185, -inf
        %v2227 = vrot.slane %v2226, 4
        %v2228 = vmax.f32 %v2226, %v2227
        %v2229 = vrot.slane %v2228, 2
        %v2230 = vmax.f32 %v2228, %v2229
        %v2231 = vrot.slane %v2230, 1
        %v2232 = vmax.f32 %v2230, %v2231
        %v2233 = vsel %vm2197, %v2186, -inf
        %v2234 = vrot.slane %v2233, 4
        %v2235 = vmax.f32 %v2233, %v2234
        %v2236 = vrot.slane %v2235, 2
        %v2237 = vmax.f32 %v2235, %v2236
        %v2238 = vrot.slane %v2237, 1
        %v2239 = vmax.f32 %v2237, %v2238
        %v2240 = vsel %vm2197, %v2187, -inf
        %v2241 = vrot.slane %v2240, 4
        %v2242 = vmax.f32 %v2240, %v2241
        %v2243 = vrot.slane %v2242, 2
        %v2244 = vmax.f32 %v2242, %v2243
        %v2245 = vrot.slane %v2244, 1
        %v2246 = vmax.f32 %v2244, %v2245
        %v2247 = vsel %vm2197, %v2188, -inf
        %v2248 = vrot.slane %v2247, 4
        %v2249 = vmax.f32 %v2247, %v2248
        %v2250 = vrot.slane %v2249, 2
        %v2251 = vmax.f32 %v2249, %v2250
        %v2252 = vrot.slane %v2251, 1
        %v2253 = vmax.f32 %v2251, %v2252
        %v2254 = vsel %vm2197, %v2189, -inf
        %v2255 = vrot.slane %v2254, 4
        %v2256 = vmax.f32 %v2254, %v2255
        %v2257 = vrot.slane %v2256, 2
        %v2258 = vmax.f32 %v2256, %v2257
        %v2259 = vrot.slane %v2258, 1
        %v2260 = vmax.f32 %v2258, %v2259
        %v2261 = vsel %vm2197, %v2190, -inf
        %v2262 = vrot.slane %v2261, 4
        %v2263 = vmax.f32 %v2261, %v2262
        %v2264 = vrot.slane %v2263, 2
        %v2265 = vmax.f32 %v2263, %v2264
        %v2266 = vrot.slane %v2265, 1
        %v2267 = vmax.f32 %v2265, %v2266
        %v2268 = vsel %vm2197, %v2191, -inf
        %v2269 = vrot.slane %v2268, 4
        %v2270 = vmax.f32 %v2268, %v2269
        %v2271 = vrot.slane %v2270, 2
        %v2272 = vmax.f32 %v2270, %v2271
        %v2273 = vrot.slane %v2272, 1
        %v2274 = vmax.f32 %v2272, %v2273
        %v2275 = vsel %vm2197, %v2192, -inf
        %v2276 = vrot.slane %v2275, 4
        %v2277 = vmax.f32 %v2275, %v2276
        %v2278 = vrot.slane %v2277, 2
        %v2279 = vmax.f32 %v2277, %v2278
        %v2280 = vrot.slane %v2279, 1
        %v2281 = vmax.f32 %v2279, %v2280
        %v2282 = vsel %vm2197, %v2193, -inf
        %v2283 = vrot.slane %v2282, 4
        %v2284 = vmax.f32 %v2282, %v2283
        %v2285 = vrot.slane %v2284, 2
        %v2286 = vmax.f32 %v2284, %v2285
        %v2287 = vrot.slane %v2286, 1
        %v2288 = vmax.f32 %v2286, %v2287
        %v2289 = vsel %vm2197, %v2194, -inf
        %v2290 = vrot.slane %v2289, 4
        %v2291 = vmax.f32 %v2289, %v2290
        %v2292 = vrot.slane %v2291, 2
        %v2293 = vmax.f32 %v2291, %v2292
        %v2294 = vrot.slane %v2293, 1
        %v2295 = vmax.f32 %v2293, %v2294
        %v2296 = vsel %vm2197, %v2195, -inf
        %v2297 = vrot.slane %v2296, 4
        %v2298 = vmax.f32 %v2296, %v2297
        %v2299 = vrot.slane %v2298, 2
        %v2300 = vmax.f32 %v2298, %v2299
        %v2301 = vrot.slane %v2300, 1
        %v2302 = vmax.f32 %v2300, %v2301
        %v2303 = vsel %vm2197, %v2196, -inf
        %v2304 = vrot.slane %v2303, 4
        %v2305 = vmax.f32 %v2303, %v2304
        %v2306 = vrot.slane %v2305, 2
        %v2307 = vmax.f32 %v2305, %v2306
        %v2308 = vrot.slane %v2307, 1
        %v2309 = vmax.f32 %v2307, %v2308
        %v2310 = vpack.c.bf16 %v2204, %v2204
        %v2311 = vpack.c.bf16 %v2211, %v2211
        %v2312 = vpack.c.bf16 %v2218, %v2218
        %v2313 = vpack.c.bf16 %v2225, %v2225
        %v2314 = vpack.c.bf16 %v2232, %v2232
        %v2315 = vpack.c.bf16 %v2239, %v2239
        %v2316 = vpack.c.bf16 %v2246, %v2246
        %v2317 = vpack.c.bf16 %v2253, %v2253
        %v2318 = vpack.c.bf16 %v2260, %v2260
        %v2319 = vpack.c.bf16 %v2267, %v2267
        %v2320 = vpack.c.bf16 %v2274, %v2274
        %v2321 = vpack.c.bf16 %v2281, %v2281
        %v2322 = vpack.c.bf16 %v2288, %v2288
        %v2323 = vpack.c.bf16 %v2295, %v2295
        %v2324 = vpack.c.bf16 %v2302, %v2302
        %v2325 = vpack.c.bf16 %v2309, %v2309
        %v2342 = vrot.slane %v2310, 2
        %v2343 = vrot.slane %v2311, 2
        %v2344 = vrot.slane %v2312, 2
        %v2345 = vrot.slane %v2313, 2
        %v2346 = vrot.slane %v2314, 2
        %v2347 = vrot.slane %v2315, 2
        %v2348 = vrot.slane %v2316, 2
        %v2349 = vrot.slane %v2317, 2
        %v2350 = vrot.slane %v2318, 2
        %v2351 = vrot.slane %v2319, 2
        %v2352 = vrot.slane %v2320, 2
        %v2353 = vrot.slane %v2321, 2
        %v2354 = vrot.slane %v2322, 2
        %v2355 = vrot.slane %v2323, 2
        %v2356 = vrot.slane %v2324, 2
        %v2357 = vrot.slane %v2325, 2
        %v2360 = vsel %vm2197, %v2310, %v2342
        %v2363 = vsel %vm2197, %v2311, %v2343
        %v2366 = vsel %vm2197, %v2312, %v2344
        %v2369 = vsel %vm2197, %v2313, %v2345
        %v2372 = vsel %vm2197, %v2314, %v2346
        %v2375 = vsel %vm2197, %v2315, %v2347
        %v2378 = vsel %vm2197, %v2316, %v2348
        %v2381 = vsel %vm2197, %v2317, %v2349
        %v2384 = vsel %vm2197, %v2318, %v2350
        %v2387 = vsel %vm2197, %v2319, %v2351
        %v2390 = vsel %vm2197, %v2320, %v2352
        %v2393 = vsel %vm2197, %v2321, %v2353
        %v2396 = vsel %vm2197, %v2322, %v2354
        %v2399 = vsel %vm2197, %v2323, %v2355
        %v2402 = vsel %vm2197, %v2324, %v2356
        %v2405 = vsel %vm2197, %v2325, %v2357
        %2406 = vst [vmem:[#allocation1] ss:$2 sm:$0xff] %v2360
        %v2407 = vld.sshfl [vmem:[#allocation1] sm:$0xff pattern:$0x75643120]
        %s2409 = scalar_lea.vmem [#allocation1], 16
        %2410 = vst [vmem:[%s2409] ss:$2 sm:$0xff] %v2363
        %v2411 = vld.sshfl [vmem:[#allocation1 + $0x10] sm:$0xff pattern:$0x75643120]
        %s2413 = scalar_lea.vmem [#allocation1], 32
        %2414 = vst [vmem:[%s2413] ss:$2 sm:$0xff] %v2366
        %v2415 = vld.sshfl [vmem:[#allocation1 + $0x20] sm:$0xff pattern:$0x75643120]
        %s2417 = scalar_lea.vmem [#allocation1], 48
        %2418 = vst [vmem:[%s2417] ss:$2 sm:$0xff] %v2369
        %v2419 = vld.sshfl [vmem:[#allocation1 + $0x30] sm:$0xff pattern:$0x75643120]
        %2421 = vst [vmem:[#allocation1] ss:$2 sm:$0xff] %v2372
        %v2422 = vld.sshfl [vmem:[#allocation1] sm:$0xff pattern:$0x75643120]
        %2424 = vst [vmem:[%s2409] ss:$2 sm:$0xff] %v2375
        %v2425 = vld.sshfl [vmem:[#allocation1 + $0x10] sm:$0xff pattern:$0x75643120]
        %2427 = vst [vmem:[%s2413] ss:$2 sm:$0xff] %v2378
        %v2428 = vld.sshfl [vmem:[#allocation1 + $0x20] sm:$0xff pattern:$0x75643120]
        %2430 = vst [vmem:[%s2417] ss:$2 sm:$0xff] %v2381
        %v2431 = vld.sshfl [vmem:[#allocation1 + $0x30] sm:$0xff pattern:$0x75643120]
        %2433 = vst [vmem:[#allocation1] ss:$2 sm:$0xff] %v2384
        %v2434 = vld.sshfl [vmem:[#allocation1] sm:$0xff pattern:$0x75643120]
        %2436 = vst [vmem:[%s2409] ss:$2 sm:$0xff] %v2387
        %v2437 = vld.sshfl [vmem:[#allocation1 + $0x10] sm:$0xff pattern:$0x75643120]
        %2439 = vst [vmem:[%s2413] ss:$2 sm:$0xff] %v2390
        %v2440 = vld.sshfl [vmem:[#allocation1 + $0x20] sm:$0xff pattern:$0x75643120]
        %2442 = vst [vmem:[%s2417] ss:$2 sm:$0xff] %v2393
        %v2443 = vld.sshfl [vmem:[#allocation1 + $0x30] sm:$0xff pattern:$0x75643120]
        %2445 = vst [vmem:[#allocation1] ss:$2 sm:$0xff] %v2396
        %v2446 = vld.sshfl [vmem:[#allocation1] sm:$0xff pattern:$0x75643120]
        %2448 = vst [vmem:[%s2409] ss:$2 sm:$0xff] %v2399
        %v2449 = vld.sshfl [vmem:[#allocation1 + $0x10] sm:$0xff pattern:$0x75643120]
        %2451 = vst [vmem:[%s2413] ss:$2 sm:$0xff] %v2402
        %v2452 = vld.sshfl [vmem:[#allocation1 + $0x20] sm:$0xff pattern:$0x75643120]
        %2454 = vst [vmem:[%s2417] ss:$2 sm:$0xff] %v2405
        %v2455 = vld.sshfl [vmem:[#allocation1 + $0x30] sm:$0xff pattern:$0x75643120]
        %v2457 = vunpack.c.l.b16 %v2407
        %v2458 = vunpack.c.l.b16 %v2411
        %v2459 = vunpack.c.l.b16 %v2415
        %v2460 = vunpack.c.l.b16 %v2419
        %v2461 = vunpack.c.l.b16 %v2422
        %v2462 = vunpack.c.l.b16 %v2425
        %v2463 = vunpack.c.l.b16 %v2428
        %v2464 = vunpack.c.l.b16 %v2431
        %v2465 = vunpack.c.l.b16 %v2434
        %v2466 = vunpack.c.l.b16 %v2437
        %v2467 = vunpack.c.l.b16 %v2440
        %v2468 = vunpack.c.l.b16 %v2443
        %v2469 = vunpack.c.l.b16 %v2446
        %v2470 = vunpack.c.l.b16 %v2449
        %v2471 = vunpack.c.l.b16 %v2452
        %v2472 = vunpack.c.l.b16 %v2455
        %v2473 = vrot.slane %v2458, 7
        %v2474 = vsel %vm2117, %v2473, %v2457
        %v2475 = vrot.slane %v2459, 6
        %v2476 = vsel %vm2121, %v2475, %v2474
        %v2477 = vrot.slane %v2460, 5
        %v2478 = vsel %vm2125, %v2477, %v2476
        %v2479 = vrot.slane %v2462, 7
        %v2480 = vsel %vm2117, %v2479, %v2461
        %v2481 = vrot.slane %v2463, 6
        %v2482 = vsel %vm2121, %v2481, %v2480
        %v2483 = vrot.slane %v2464, 5
        %v2484 = vsel %vm2125, %v2483, %v2482
        %v2485 = vrot.slane %v2466, 7
        %v2486 = vsel %vm2117, %v2485, %v2465
        %v2487 = vrot.slane %v2467, 6
        %v2488 = vsel %vm2121, %v2487, %v2486
        %v2489 = vrot.slane %v2468, 5
        %v2490 = vsel %vm2125, %v2489, %v2488
        %v2491 = vrot.slane %v2470, 7
        %v2492 = vsel %vm2117, %v2491, %v2469
        %v2493 = vrot.slane %v2471, 6
        %v2494 = vsel %vm2121, %v2493, %v2492
        %v2495 = vrot.slane %v2472, 5
        %v2496 = vsel %vm2125, %v2495, %v2494
        %v2497 = vpack.c.b16 %v2478, %v2478
        %v2498 = vpack.c.b16 %v2484, %v2484
        %v2499 = vpack.c.b16 %v2490, %v2490
        %v2500 = vpack.c.b16 %v2496, %v2496
        %v2501 = vrot.slane %v2497, 2
        %v2502 = vrot.slane %v2498, 2
        %v2503 = vrot.slane %v2499, 2
        %v2504 = vrot.slane %v2500, 2
        %v2507 = vsel %vm2197, %v2497, %v2501
        %v2510 = vsel %vm2197, %v2498, %v2502
        %v2513 = vsel %vm2197, %v2499, %v2503
        %v2516 = vsel %vm2197, %v2500, %v2504
        %2521 = vst [vmem:[%s211] sm:$0x3] %v2507
        %2522 = vst [vmem:[%s211 + $0x2] sm:$0x3] %v2510
        %2523 = vst [vmem:[%s211 + $0x4] sm:$0x3] %v2513
        %2524 = vst [vmem:[%s211 + $0x6] sm:$0x3] %v2516
        %s2525 = sand.u32 %s105, 1
        %s2526 = scalar_lea.sflag [#allocation6], %s2525
        %s2527 = sand.u32 %s105, 1
        %s2528 = smul.addr %s2527, 32
        %s2529 = scalar_lea.vmem [#allocation5], %s2528
        %s2530 = sand.u32 %s135, 1
        %s2531 = scalar_lea.sflag [#allocation8], %s2530
        %s2532 = sand.u32 %s135, 1
        %s2533 = smul.addr %s2532, 8
        %s2534 = scalar_lea.vmem [#allocation7], %s2533
        // Predicated region
        $region48: #{tpu_custom_call.1} parent=27 // pred_check
          %p2535 = pneg %p115
        $region49: #{tpu_custom_call.1} parent=27 // pred_check_branch
          %2537 = sbr.rel (%p2535) target = $region51
        $region50: #{tpu_custom_call.1} parent=27 // pred_region
          %s2538 = smul.u32 8, %s29
          %2540 = vsyncadd %s2526, 0
          %s2541 = sadd.s32 %s27, %s2538
          %s2542 = smul.addr %s28, 8
          %s2543 = sadd.s32 %s2541, %s2542
          %s2544 = smul.addr %s2543, 4
          %s2545 = scalar_lea.hbm %s3, %s2544
          %s2546 = sshll.u32 %s2529, 4
          %s2547 = int_to_ptr.vmem [resolvable:$true] %s2546
          %s2548 = sshll.u32 %s2545, 4
          %s2549 = int_to_ptr.hbm [resolvable:$true] %s2548
          %2554 = dma.vmem_to_hbm [thread:$0]  %s2547, 512, %s2549, %s2526, 64, 64, 4
        $region51: #{tpu_custom_call.1} parent=27 // pred_fallthru
          _
        // Predicated region
        $region52: #{tpu_custom_call.1} parent=27 // pred_check
          %p2555 = pneg %p145
        $region53: #{tpu_custom_call.1} parent=27 // pred_check_branch
          %2557 = sbr.rel (%p2555) target = $region55
        $region54: #{tpu_custom_call.1} parent=27 // pred_region
          %s2558 = smul.u32 4, %s29
          %2560 = vsyncadd %s2531, 0
          %s2561 = sadd.s32 %s27, %s2558
          %s2562 = smul.addr %s28, 4
          %s2563 = sadd.s32 %s2561, %s2562
          %s2564 = smul.addr %s2563, 2
          %s2565 = scalar_lea.hbm %s4, %s2564
          %s2566 = sshll.u32 %s2534, 4
          %s2567 = int_to_ptr.vmem [resolvable:$true] %s2566
          %s2568 = sshll.u32 %s2565, 4
          %s2569 = int_to_ptr.hbm [resolvable:$true] %s2568
          %2574 = dma.vmem_to_hbm [thread:$0]  %s2567, 128, %s2569, %s2531, 32, 32, 2
        $region55: #{tpu_custom_call.1} parent=27 // pred_fallthru
          _
      $region28: #{tpu_custom_call.1} parent=5 // pred_fallthru
        _
      %p2575 = scmp.le.s32.totalorder 2, %s17
      // Predicated region
      $region56: #{tpu_custom_call.1} parent=5 // pred_check
        %p2576 = pneg %p2575
      $region57: #{tpu_custom_call.1} parent=5 // pred_check_branch
        %2578 = sbr.rel (%p2576) target = $region59
      $region58: #{tpu_custom_call.1} parent=5 // pred_region
        %s2579 = ssub.s32 %s17, 2
        // Predicated region
        $region60: #{tpu_custom_call.1} parent=58 // pred_check
          %p2580 = pneg %p121
        $region61: #{tpu_custom_call.1} parent=58 // pred_check_branch
          %2582 = sbr.rel (%p2580) target = $region63
        $region62: #{tpu_custom_call.1} parent=58 // pred_region
          %s2583 = sand.u32 %s106, 1
          %s2584 = scalar_lea.sflag [#allocation6], %s2583
          %s2585 = sand.u32 %s106, 1
          %s2586 = smul.addr %s2585, 32
          %s2587 = scalar_lea.vmem [#allocation5], %s2586
          %2589 = dma.done %s2584, 512
        $region63: #{tpu_custom_call.1} parent=58 // pred_fallthru
          _
        // Predicated region
        $region64: #{tpu_custom_call.1} parent=58 // pred_check
          %p2590 = pneg %p151
        $region65: #{tpu_custom_call.1} parent=58 // pred_check_branch
          %2592 = sbr.rel (%p2590) target = $region67
        $region66: #{tpu_custom_call.1} parent=58 // pred_region
          %s2593 = sand.u32 %s136, 1
          %s2594 = scalar_lea.sflag [#allocation8], %s2593
          %s2595 = sand.u32 %s136, 1
          %s2596 = smul.addr %s2595, 8
          %s2597 = scalar_lea.vmem [#allocation7], %s2596
          %2599 = dma.done %s2594, 128
        $region67: #{tpu_custom_call.1} parent=58 // pred_fallthru
          _
      $region59: #{tpu_custom_call.1} parent=5 // pred_fallthru
        _
    $region6: #{tpu_custom_call.1} parent=1 // loop_footer
      %s21 = sadd.s32 1, %s17
    $region7: #{tpu_custom_call.1} parent=1 // loop_footer_branch
      %16 = sbr.rel target = $region3
    $region8: #{tpu_custom_call.1} parent=1 // loop_exit
      _
    %2600 = vsyncpa [#allocation6], 1
    %s2601 = scalar_lea.sflag [#allocation6], 1
    %2602 = vsyncpa %s2601, 1
    %2603 = vsyncpa [#allocation8], 1
    %s2604 = scalar_lea.sflag [#allocation8], 1
    %2605 = vsyncpa %s2604, 1
  %2606 = vsyncmov [#allocation4]
  %s2607 = vpop.sfrf %2606
  %p2608 = scmp.eq.s32.totalorder %s2607, 0
  %p2609 = pneg %p2608
  %2611 = shalt.err (%p2609)

</llo_original>
